<compile_context>
chip_gen: v7x
topology: tpu7x:2x2x1
jax: 0.10.0
libtpu: 0.0.40
codegen_flags: <defaults>
</compile_context>

<pallas_src>
import functools

import jax
import jax.numpy as jnp
from jax.experimental import pallas as pl
from jax.experimental.pallas import tpu as pltpu


def _theta_kernel(p_ref, q_ref, o_ref, *, scale):
    """One queue tile: out = clamp(P @ queue_tile, -1, 1) * scale."""
    acc = jnp.dot(p_ref[...], q_ref[...], preferred_element_type=jnp.float32)
    o_ref[...] = (jnp.clip(acc, -1.0, 1.0) * scale).astype(o_ref.dtype)


def _vmem_capacity_bytes():
    try:
        return int(pltpu.get_tpu_info().vmem_capacity_bytes)
    except Exception:
        return 64 << 20  # conservative (v7x per-TC VMEM)


def _num_tensorcores():
    try:
        dev = jax.devices()[0]
    except Exception:
        return 1
    for attr in ("num_cores", "core_count", "num_tensorcores"):
        n = getattr(dev, attr, None)
        if isinstance(n, int) and 1 <= n <= 16:
            return n
    return 1


def _pick_tn(q, d, rows, q_bytes, out_bytes, vmem_budget, num_cores):
    """Largest 128-multiple tile width dividing q whose double-buffered queue
    + output tiles fit the budget.  Single-TC parts may take tn = q (one grid
    step); multi-TC parts keep the step count divisible by the core count."""
    assert q % 128 == 0, "queue_size must be a multiple of 128"

    def tile_bytes(t):
        # double-buffered queue tile + double-buffered output tile
        return 2 * t * (d * q_bytes + rows * out_bytes)

    for t in range(q, 127, -128):
        if q % t:
            continue
        if tile_bytes(t) > vmem_budget:
            continue
        steps = q // t
        if num_cores >= 2 and t > 128 and steps % num_cores:
            continue  # keep cores evenly loaded on multi-TC chips
        return t
    return 128


def compute_theta_stacked(p_stack, queue, *, scale, out_dtype=jnp.float32):
    """clamp([p1;p2] @ queue, -1, 1) * scale in a single sweep over the queue."""
    rows, d = p_stack.shape
    d2, q = queue.shape
    assert d == d2

    qb = jnp.dtype(queue.dtype).itemsize
    pb = jnp.dtype(p_stack.dtype).itemsize
    ob = jnp.dtype(out_dtype).itemsize

    cap = _vmem_capacity_bytes()
    num_cores = _num_tensorcores()
    # ~32 MiB tiling budget on 64 MiB parts (v7x), up to 48 MiB on 128 MiB parts.
    budget = min(cap // 2, 48 << 20)
    tn = _pick_tn(q, d, rows, qb, ob, budget, num_cores)

    # Actual per-call need: pipelined queue/output tiles + resident p block.
    need = 2 * tn * (d * qb + rows * ob) + 2 * rows * d * pb + (1 << 20)
    vmem_limit = int(min(max(need, 32 << 20), cap - (8 << 20)))

    kernel = functools.partial(_theta_kernel, scale=scale)

    def run(dim_sem):
        return pl.pallas_call(
            kernel,
            out_shape=jax.ShapeDtypeStruct((rows, q), out_dtype),
            grid=(q // tn,),
            in_specs=[
                pl.BlockSpec((rows, d), lambda j: (0, 0)),   # [p1;p2], resident
                pl.BlockSpec((d, tn), lambda j: (0, j)),     # queue tile
            ],
            out_specs=pl.BlockSpec((rows, tn), lambda j: (0, j)),
            compiler_params=pltpu.CompilerParams(
                dimension_semantics=dim_sem,
                vmem_limit_bytes=vmem_limit),
        )(p_stack, queue)

    if num_cores >= 2:
        try:
            out = run((pltpu.CORE_PARALLEL,))
            jax.block_until_ready(out)
            return out
        except Exception:
            pass  # fall back to the portable semantics below
    return run((pltpu.PARALLEL,))


def prototype_forward(p1, g2, p2, g1, label, queue, index=0, scale=30.0,
                      compute_dtype=jnp.bfloat16, out_dtype=jnp.float32):
    # label is unused for loss_type='softmax' (no margin scatter is applied).
    del label
    b = p1.shape[0]
    cd = compute_dtype
    cast = lambda x: x if x.dtype == cd else x.astype(cd)
    p1c, p2c, g1c, g2c = cast(p1), cast(p2), cast(g1), cast(g2)

    p_stack = jnp.concatenate([p1c, p2c], axis=0)              # (2B, D)
    out = compute_theta_stacked(p_stack, cast(queue), scale=scale,
                                out_dtype=out_dtype)           # (2B, Q)

    # Insertion-window fixup in the wrapper: columns [index, index+B) of the
    # queue are logically overwritten with g.T, so those output columns are
    # clamp(p @ g.T, -1, 1) * scale.  f32 accumulation matches the kernel path.
    pg = jnp.concatenate(
        [jnp.dot(p1c, g2c.T, preferred_element_type=jnp.float32),
         jnp.dot(p2c, g1c.T, preferred_element_type=jnp.float32)],
        axis=0)                                                 # (2B, B)
    repl = (jnp.clip(pg, -1.0, 1.0) * scale).astype(out.dtype)
    # TODO(synk): wraparound (index + B > Q) not handled; update-slice clamps.
    out = jax.lax.dynamic_update_slice(
        out, repl, (jnp.int32(0), jnp.int32(index)))
    return out[:b], out[b:]


if __name__ == "__main__":
    # Small, alignment-friendly shapes consistent with the module.
    B, D, Q = 8, 256, 2048
    SCALE = 30.0

    key = jax.random.PRNGKey(0)
    k_q, k_p1, k_g2, k_p2, k_g1, k_lbl = jax.random.split(key, 6)

    # Deterministic queue init mirroring torch:
    # uniform(-1,1).renorm_(2,1,1e-5).mul_(1e5) -> unit-norm columns.
    queue_f32 = jax.random.uniform(k_q, (D, Q), jnp.float32, minval=-1.0, maxval=1.0)
    col_norm = jnp.linalg.norm(queue_f32, axis=0, keepdims=True)
    queue_f32 = queue_f32 * (jnp.minimum(1.0, 1e-5 / col_norm) * 1e5)
    # Persistent queue stored in bf16 (one-time cast; no per-call cast in forward).
    queue = queue_f32.astype(jnp.bfloat16)

    def unit_rows(k, shape):
        x = jax.random.normal(k, shape, jnp.float32)
        return x / jnp.linalg.norm(x, axis=1, keepdims=True)

    p1 = unit_rows(k_p1, (B, D))
    g2 = unit_rows(k_g2, (B, D))
    p2 = unit_rows(k_p2, (B, D))
    g1 = unit_rows(k_g1, (B, D))
    label = jax.random.randint(k_lbl, (B,), 0, Q, jnp.int32)

    def reference(p, g, index):
        cd = jnp.bfloat16
        q = queue.astype(cd)
        q = q.at[:, index:index + B].set(g.astype(cd).T)
        out = jnp.dot(p.astype(cd), q, preferred_element_type=jnp.float32)
        return jnp.clip(out, -1.0, 1.0) * SCALE

    ok = True
    # index=0 (the module's initial state) plus an index not aligned to any
    # tile boundary, to exercise the wrapper-side insertion fixup.
    for INDEX in (0, 1020):
        out1, out2 = prototype_forward(p1, g2, p2, g1, label, queue,
                                       index=INDEX, scale=SCALE)
        jax.block_until_ready((out1, out2))
        ref1 = reference(p1, g2, INDEX)
        ref2 = reference(p2, g1, INDEX)
        ok &= out1.shape == (B, Q) and out2.shape == (B, Q)
        ok &= bool(jnp.allclose(out1, ref1, atol=5e-3, rtol=1e-3))
        ok &= bool(jnp.allclose(out2, ref2, atol=5e-3, rtol=1e-3))

    assert ok
    print("KERNEL_OK")
</pallas_src>

<mosaic_0001>
module attributes {stable_mosaic.version = 11 : i64} {
  func.func @_theta_kernel(%arg0: i32, %arg1: memref<16x256xbf16, #tpu.memory_space<vmem>>, %arg2: memref<256x2048xbf16, #tpu.memory_space<vmem>>, %arg3: memref<16x2048xf32, #tpu.memory_space<vmem>>) attributes {dimension_semantics = [#tpu.dimension_semantics<parallel>], iteration_bounds = array<i64: 1>, scalar_prefetch = 0 : i64, scratch_operands = 0 : i64, tpu.core_type = #tpu.core_type<tc>, window_params = [{pipeline_mode = #tpu.pipeline_mode<synchronous>, transform_indices = @transform_0, window_bounds = array<i64: 16, 256>}, {transform_indices = @transform_1, window_bounds = array<i64: 256, 2048>}, {transform_indices = @transform_2, window_bounds = array<i64: 16, 2048>}]} {
    %c0 = arith.constant 0 : index
    %c0_0 = arith.constant 0 : index
    %0 = vector.load %arg1[%c0, %c0_0] : memref<16x256xbf16, #tpu.memory_space<vmem>>, vector<16x256xbf16>
    %c0_1 = arith.constant 0 : index
    %c0_2 = arith.constant 0 : index
    %1 = vector.load %arg2[%c0_1, %c0_2] : memref<256x2048xbf16, #tpu.memory_space<vmem>>, vector<256x2048xbf16>
    %cst = arith.constant dense<0.000000e+00> : vector<16x2048xf32>
    %2 = tpu.matmul %0, %1, %cst {dimension_numbers = #tpu.dot_dimension_numbers<[1], [0], [0], [1], [0, 0, 1, 1], [], []>} : vector<16x256xbf16>, vector<256x2048xbf16>, vector<16x2048xf32> -> vector<16x2048xf32>
    %cst_3 = arith.constant -1.000000e+00 : f32
    %cst_4 = arith.constant 1.000000e+00 : f32
    %3 = vector.broadcast %cst_3 : f32 to vector<16x2048xf32>
    %4 = arith.maximumf %3, %2 : vector<16x2048xf32>
    %5 = vector.broadcast %cst_4 : f32 to vector<16x2048xf32>
    %6 = arith.minimumf %5, %4 : vector<16x2048xf32>
    %cst_5 = arith.constant 3.000000e+01 : f32
    %7 = vector.broadcast %cst_5 : f32 to vector<16x2048xf32>
    %8 = arith.mulf %6, %7 : vector<16x2048xf32>
    %c0_6 = arith.constant 0 : index
    %c0_7 = arith.constant 0 : index
    %9 = vector.load %arg3[%c0_6, %c0_7] : memref<16x2048xf32, #tpu.memory_space<vmem>>, vector<16x2048xf32>
    tpu.vector_store %arg3[%c0_6, %c0_7], %8 {strides = array<i32>} : memref<16x2048xf32, #tpu.memory_space<vmem>>, vector<16x2048xf32>,
    return
  }
  func.func @transform_0(%arg0: i32) -> (i32, i32) {
    %c0_i32 = arith.constant 0 : i32
    %c0_i32_0 = arith.constant 0 : i32
    %c0_i32_1 = arith.constant 0 : i32
    return %c0_i32, %c0_i32_0 : i32, i32
  }
  func.func @transform_1(%arg0: i32) -> (i32, i32) {
    %c0_i32 = arith.constant 0 : i32
    %c0_i32_0 = arith.constant 0 : i32
    return %c0_i32, %arg0 : i32, i32
  }
  func.func @transform_2(%arg0: i32) -> (i32, i32) {
    %c0_i32 = arith.constant 0 : i32
    %c0_i32_0 = arith.constant 0 : i32
    return %c0_i32, %arg0 : i32, i32
  }
}

</mosaic_0001>

<llo_original>
// kernel: tpu_custom_call.1
$region0: #{tpu_custom_call.1}
  #allocation0 [shape = 'u32[]', space=smem, size = 0x4, offset = 0x4, fixed_abs, tag = 'smem constant byte address 0x4 - core index']
  #allocation1 [shape = 'u32[144,128]{1,0:T(1,128)}', space=vmem, size = 0x12000, scoped, tag = 'internal scratch']
  %s0 = inlined_call_operand.hbm [shape: bf16[16,256], index: 0, kind: input, shape index: {}]
  %s1 = inlined_call_operand.hbm [shape: bf16[256,2048], index: 1, kind: input, shape index: {}]
  %s2 = inlined_call_operand.hbm [shape: f32[16,2048], index: 2, kind: output, shape index: {}]
  %s3 = sld [smem:[#allocation0]]
  $region26: #{tpu_custom_call.1} parent=0
    _
  %s5 = ssub.s32 1, %s3
  %s6 = scalar_select 0, %s5, %s3
  $region1: #{tpu_custom_call.1} parent=0
    #allocation2 [shape = 'u8[8192]{0}', space=vmem, size = 0x2000, scoped, tag = 'input window, operand 0, single buffered']
    #allocation3 [shape = 's32[1]{0}', space=sflag, size = 0x4, scoped, tag = 'scoped memory for tpu_custom_call.1']
    #allocation4 [shape = 's32[1]{0}', space=sflag, size = 0x4, scoped, tag = 'scoped memory for tpu_custom_call.1']
    #allocation5 [shape = 'u8[1048576]{0}', space=vmem, size = 0x100000, scoped, tag = 'input window, operand 1, single buffered']
    #allocation6 [shape = 's32[1]{0}', space=sflag, size = 0x4, scoped, tag = 'scoped memory for tpu_custom_call.1']
    #allocation7 [shape = 'u8[131072]{0}', space=vmem, size = 0x20000, scoped, tag = 'output window, operand 0, single buffered']
    %7 = vsyncpa [#allocation3], 0
    %8 = vsyncpa [#allocation6], 0
    %9 = vsyncpa [#allocation4], 0
    // Predicated region
    $region2: #{tpu_custom_call.1} parent=1 // pred_check
      _
    $region3: #{tpu_custom_call.1} parent=1 // pred_check_branch
      %11 = sbr.rel (0) target = $region5
    $region4: #{tpu_custom_call.1} parent=1 // pred_region
      %s13 = ssub.s32 256, 256
      %14 = vsyncadd [#allocation3], %s13
      %s15 = sshll.u32 [#allocation2], 4
      %s16 = int_to_ptr.vmem [resolvable:$true] %s15
      %21 = dma.hbm_to_vmem [thread:$0]  %s0, 256, %s16, [#allocation3], 128, 128, 8
    $region5: #{tpu_custom_call.1} parent=1 // pred_fallthru
      _
    // Predicated region
    $region6: #{tpu_custom_call.1} parent=1 // pred_check
      _
    $region7: #{tpu_custom_call.1} parent=1 // pred_check_branch
      %23 = sbr.rel (0) target = $region9
    $region8: #{tpu_custom_call.1} parent=1 // pred_region
      %s25 = ssub.s32 32768, 32768
      %26 = vsyncadd [#allocation6], %s25
      %s27 = sshll.u32 [#allocation5], 4
      %s28 = int_to_ptr.vmem [resolvable:$true] %s27
      %33 = dma.hbm_to_vmem [thread:$0]  %s1, 32768, %s28, [#allocation6], 1024, 1024, 64
    $region9: #{tpu_custom_call.1} parent=1 // pred_fallthru
      _
    // Predicated region
    $region10: #{tpu_custom_call.1} parent=1 // pred_check
      _
    $region11: #{tpu_custom_call.1} parent=1 // pred_check_branch
      %35 = sbr.rel (0) target = $region13
    $region12: #{tpu_custom_call.1} parent=1 // pred_region
      %36 = dma.done [#allocation3], 256
    $region13: #{tpu_custom_call.1} parent=1 // pred_fallthru
      _
    // Predicated region
    $region14: #{tpu_custom_call.1} parent=1 // pred_check
      _
    $region15: #{tpu_custom_call.1} parent=1 // pred_check_branch
      %38 = sbr.rel (0) target = $region17
    $region16: #{tpu_custom_call.1} parent=1 // pred_region
      %39 = dma.done [#allocation6], 32768
    $region17: #{tpu_custom_call.1} parent=1 // pred_fallthru
      _
    %v40 = vld [vmem:[#allocation2] sm:$0xff]
    %v41 = vld [vmem:[#allocation2 + $0x8] sm:$0xff]
    %v42 = vld [vmem:[#allocation5] sm:$0xff]
    %v43 = vld [vmem:[#allocation5 + $0x8] sm:$0xff]
    %v44 = vld [vmem:[#allocation5 + $0x10] sm:$0xff]
    %v45 = vld [vmem:[#allocation5 + $0x18] sm:$0xff]
    %v46 = vld [vmem:[#allocation5 + $0x20] sm:$0xff]
    %v47 = vld [vmem:[#allocation5 + $0x28] sm:$0xff]
    %v48 = vld [vmem:[#allocation5 + $0x30] sm:$0xff]
    %v49 = vld [vmem:[#allocation5 + $0x38] sm:$0xff]
    %v50 = vld [vmem:[#allocation5 + $0x40] sm:$0xff]
    %v51 = vld [vmem:[#allocation5 + $0x48] sm:$0xff]
    %v52 = vld [vmem:[#allocation5 + $0x50] sm:$0xff]
    %v53 = vld [vmem:[#allocation5 + $0x58] sm:$0xff]
    %v54 = vld [vmem:[#allocation5 + $0x60] sm:$0xff]
    %v55 = vld [vmem:[#allocation5 + $0x68] sm:$0xff]
    %v56 = vld [vmem:[#allocation5 + $0x70] sm:$0xff]
    %v57 = vld [vmem:[#allocation5 + $0x78] sm:$0xff]
    %v58 = vld [vmem:[#allocation5 + $0x80] sm:$0xff]
    %v59 = vld [vmem:[#allocation5 + $0x88] sm:$0xff]
    %v60 = vld [vmem:[#allocation5 + $0x90] sm:$0xff]
    %v61 = vld [vmem:[#allocation5 + $0x98] sm:$0xff]
    %v62 = vld [vmem:[#allocation5 + $0xa0] sm:$0xff]
    %v63 = vld [vmem:[#allocation5 + $0xa8] sm:$0xff]
    %v64 = vld [vmem:[#allocation5 + $0xb0] sm:$0xff]
    %v65 = vld [vmem:[#allocation5 + $0xb8] sm:$0xff]
    %v66 = vld [vmem:[#allocation5 + $0xc0] sm:$0xff]
    %v67 = vld [vmem:[#allocation5 + $0xc8] sm:$0xff]
    %v68 = vld [vmem:[#allocation5 + $0xd0] sm:$0xff]
    %v69 = vld [vmem:[#allocation5 + $0xd8] sm:$0xff]
    %v70 = vld [vmem:[#allocation5 + $0xe0] sm:$0xff]
    %v71 = vld [vmem:[#allocation5 + $0xe8] sm:$0xff]
    %v72 = vld [vmem:[#allocation5 + $0xf0] sm:$0xff]
    %v73 = vld [vmem:[#allocation5 + $0xf8] sm:$0xff]
    %v74 = vld [vmem:[#allocation5 + $0x100] sm:$0xff]
    %v75 = vld [vmem:[#allocation5 + $0x108] sm:$0xff]
    %v76 = vld [vmem:[#allocation5 + $0x110] sm:$0xff]
    %v77 = vld [vmem:[#allocation5 + $0x118] sm:$0xff]
    %v78 = vld [vmem:[#allocation5 + $0x120] sm:$0xff]
    %v79 = vld [vmem:[#allocation5 + $0x128] sm:$0xff]
    %v80 = vld [vmem:[#allocation5 + $0x130] sm:$0xff]
    %v81 = vld [vmem:[#allocation5 + $0x138] sm:$0xff]
    %v82 = vld [vmem:[#allocation5 + $0x140] sm:$0xff]
    %v83 = vld [vmem:[#allocation5 + $0x148] sm:$0xff]
    %v84 = vld [vmem:[#allocation5 + $0x150] sm:$0xff]
    %v85 = vld [vmem:[#allocation5 + $0x158] sm:$0xff]
    %v86 = vld [vmem:[#allocation5 + $0x160] sm:$0xff]
    %v87 = vld [vmem:[#allocation5 + $0x168] sm:$0xff]
    %v88 = vld [vmem:[#allocation5 + $0x170] sm:$0xff]
    %v89 = vld [vmem:[#allocation5 + $0x178] sm:$0xff]
    %v90 = vld [vmem:[#allocation5 + $0x180] sm:$0xff]
    %v91 = vld [vmem:[#allocation5 + $0x188] sm:$0xff]
    %v92 = vld [vmem:[#allocation5 + $0x190] sm:$0xff]
    %v93 = vld [vmem:[#allocation5 + $0x198] sm:$0xff]
    %v94 = vld [vmem:[#allocation5 + $0x1a0] sm:$0xff]
    %v95 = vld [vmem:[#allocation5 + $0x1a8] sm:$0xff]
    %v96 = vld [vmem:[#allocation5 + $0x1b0] sm:$0xff]
    %v97 = vld [vmem:[#allocation5 + $0x1b8] sm:$0xff]
    %v98 = vld [vmem:[#allocation5 + $0x1c0] sm:$0xff]
    %v99 = vld [vmem:[#allocation5 + $0x1c8] sm:$0xff]
    %v100 = vld [vmem:[#allocation5 + $0x1d0] sm:$0xff]
    %v101 = vld [vmem:[#allocation5 + $0x1d8] sm:$0xff]
    %v102 = vld [vmem:[#allocation5 + $0x1e0] sm:$0xff]
    %v103 = vld [vmem:[#allocation5 + $0x1e8] sm:$0xff]
    %v104 = vld [vmem:[#allocation5 + $0x1f0] sm:$0xff]
    %v105 = vld [vmem:[#allocation5 + $0x1f8] sm:$0xff]
    %v106 = vld [vmem:[#allocation5 + $0x200] sm:$0xff]
    %v107 = vld [vmem:[#allocation5 + $0x208] sm:$0xff]
    %v108 = vld [vmem:[#allocation5 + $0x210] sm:$0xff]
    %v109 = vld [vmem:[#allocation5 + $0x218] sm:$0xff]
    %v110 = vld [vmem:[#allocation5 + $0x220] sm:$0xff]
    %v111 = vld [vmem:[#allocation5 + $0x228] sm:$0xff]
    %v112 = vld [vmem:[#allocation5 + $0x230] sm:$0xff]
    %v113 = vld [vmem:[#allocation5 + $0x238] sm:$0xff]
    %v114 = vld [vmem:[#allocation5 + $0x240] sm:$0xff]
    %v115 = vld [vmem:[#allocation5 + $0x248] sm:$0xff]
    %v116 = vld [vmem:[#allocation5 + $0x250] sm:$0xff]
    %v117 = vld [vmem:[#allocation5 + $0x258] sm:$0xff]
    %v118 = vld [vmem:[#allocation5 + $0x260] sm:$0xff]
    %v119 = vld [vmem:[#allocation5 + $0x268] sm:$0xff]
    %v120 = vld [vmem:[#allocation5 + $0x270] sm:$0xff]
    %v121 = vld [vmem:[#allocation5 + $0x278] sm:$0xff]
    %v122 = vld [vmem:[#allocation5 + $0x280] sm:$0xff]
    %v123 = vld [vmem:[#allocation5 + $0x288] sm:$0xff]
    %v124 = vld [vmem:[#allocation5 + $0x290] sm:$0xff]
    %v125 = vld [vmem:[#allocation5 + $0x298] sm:$0xff]
    %v126 = vld [vmem:[#allocation5 + $0x2a0] sm:$0xff]
    %v127 = vld [vmem:[#allocation5 + $0x2a8] sm:$0xff]
    %v128 = vld [vmem:[#allocation5 + $0x2b0] sm:$0xff]
    %v129 = vld [vmem:[#allocation5 + $0x2b8] sm:$0xff]
    %v130 = vld [vmem:[#allocation5 + $0x2c0] sm:$0xff]
    %v131 = vld [vmem:[#allocation5 + $0x2c8] sm:$0xff]
    %v132 = vld [vmem:[#allocation5 + $0x2d0] sm:$0xff]
    %v133 = vld [vmem:[#allocation5 + $0x2d8] sm:$0xff]
    %v134 = vld [vmem:[#allocation5 + $0x2e0] sm:$0xff]
    %v135 = vld [vmem:[#allocation5 + $0x2e8] sm:$0xff]
    %v136 = vld [vmem:[#allocation5 + $0x2f0] sm:$0xff]
    %v137 = vld [vmem:[#allocation5 + $0x2f8] sm:$0xff]
    %v138 = vld [vmem:[#allocation5 + $0x300] sm:$0xff]
    %v139 = vld [vmem:[#allocation5 + $0x308] sm:$0xff]
    %v140 = vld [vmem:[#allocation5 + $0x310] sm:$0xff]
    %v141 = vld [vmem:[#allocation5 + $0x318] sm:$0xff]
    %v142 = vld [vmem:[#allocation5 + $0x320] sm:$0xff]
    %v143 = vld [vmem:[#allocation5 + $0x328] sm:$0xff]
    %v144 = vld [vmem:[#allocation5 + $0x330] sm:$0xff]
    %v145 = vld [vmem:[#allocation5 + $0x338] sm:$0xff]
    %v146 = vld [vmem:[#allocation5 + $0x340] sm:$0xff]
    %v147 = vld [vmem:[#allocation5 + $0x348] sm:$0xff]
    %v148 = vld [vmem:[#allocation5 + $0x350] sm:$0xff]
    %v149 = vld [vmem:[#allocation5 + $0x358] sm:$0xff]
    %v150 = vld [vmem:[#allocation5 + $0x360] sm:$0xff]
    %v151 = vld [vmem:[#allocation5 + $0x368] sm:$0xff]
    %v152 = vld [vmem:[#allocation5 + $0x370] sm:$0xff]
    %v153 = vld [vmem:[#allocation5 + $0x378] sm:$0xff]
    %v154 = vld [vmem:[#allocation5 + $0x380] sm:$0xff]
    %v155 = vld [vmem:[#allocation5 + $0x388] sm:$0xff]
    %v156 = vld [vmem:[#allocation5 + $0x390] sm:$0xff]
    %v157 = vld [vmem:[#allocation5 + $0x398] sm:$0xff]
    %v158 = vld [vmem:[#allocation5 + $0x3a0] sm:$0xff]
    %v159 = vld [vmem:[#allocation5 + $0x3a8] sm:$0xff]
    %v160 = vld [vmem:[#allocation5 + $0x3b0] sm:$0xff]
    %v161 = vld [vmem:[#allocation5 + $0x3b8] sm:$0xff]
    %v162 = vld [vmem:[#allocation5 + $0x3c0] sm:$0xff]
    %v163 = vld [vmem:[#allocation5 + $0x3c8] sm:$0xff]
    %v164 = vld [vmem:[#allocation5 + $0x3d0] sm:$0xff]
    %v165 = vld [vmem:[#allocation5 + $0x3d8] sm:$0xff]
    %v166 = vld [vmem:[#allocation5 + $0x3e0] sm:$0xff]
    %v167 = vld [vmem:[#allocation5 + $0x3e8] sm:$0xff]
    %v168 = vld [vmem:[#allocation5 + $0x3f0] sm:$0xff]
    %v169 = vld [vmem:[#allocation5 + $0x3f8] sm:$0xff]
    %v170 = vld [vmem:[#allocation5 + $0x400] sm:$0xff]
    %v171 = vld [vmem:[#allocation5 + $0x408] sm:$0xff]
    %v172 = vld [vmem:[#allocation5 + $0x410] sm:$0xff]
    %v173 = vld [vmem:[#allocation5 + $0x418] sm:$0xff]
    %v174 = vld [vmem:[#allocation5 + $0x420] sm:$0xff]
    %v175 = vld [vmem:[#allocation5 + $0x428] sm:$0xff]
    %v176 = vld [vmem:[#allocation5 + $0x430] sm:$0xff]
    %v177 = vld [vmem:[#allocation5 + $0x438] sm:$0xff]
    %v178 = vld [vmem:[#allocation5 + $0x440] sm:$0xff]
    %v179 = vld [vmem:[#allocation5 + $0x448] sm:$0xff]
    %v180 = vld [vmem:[#allocation5 + $0x450] sm:$0xff]
    %v181 = vld [vmem:[#allocation5 + $0x458] sm:$0xff]
    %v182 = vld [vmem:[#allocation5 + $0x460] sm:$0xff]
    %v183 = vld [vmem:[#allocation5 + $0x468] sm:$0xff]
    %v184 = vld [vmem:[#allocation5 + $0x470] sm:$0xff]
    %v185 = vld [vmem:[#allocation5 + $0x478] sm:$0xff]
    %v186 = vld [vmem:[#allocation5 + $0x480] sm:$0xff]
    %v187 = vld [vmem:[#allocation5 + $0x488] sm:$0xff]
    %v188 = vld [vmem:[#allocation5 + $0x490] sm:$0xff]
    %v189 = vld [vmem:[#allocation5 + $0x498] sm:$0xff]
    %v190 = vld [vmem:[#allocation5 + $0x4a0] sm:$0xff]
    %v191 = vld [vmem:[#allocation5 + $0x4a8] sm:$0xff]
    %v192 = vld [vmem:[#allocation5 + $0x4b0] sm:$0xff]
    %v193 = vld [vmem:[#allocation5 + $0x4b8] sm:$0xff]
    %v194 = vld [vmem:[#allocation5 + $0x4c0] sm:$0xff]
    %v195 = vld [vmem:[#allocation5 + $0x4c8] sm:$0xff]
    %v196 = vld [vmem:[#allocation5 + $0x4d0] sm:$0xff]
    %v197 = vld [vmem:[#allocation5 + $0x4d8] sm:$0xff]
    %v198 = vld [vmem:[#allocation5 + $0x4e0] sm:$0xff]
    %v199 = vld [vmem:[#allocation5 + $0x4e8] sm:$0xff]
    %v200 = vld [vmem:[#allocation5 + $0x4f0] sm:$0xff]
    %v201 = vld [vmem:[#allocation5 + $0x4f8] sm:$0xff]
    %v202 = vld [vmem:[#allocation5 + $0x500] sm:$0xff]
    %v203 = vld [vmem:[#allocation5 + $0x508] sm:$0xff]
    %v204 = vld [vmem:[#allocation5 + $0x510] sm:$0xff]
    %v205 = vld [vmem:[#allocation5 + $0x518] sm:$0xff]
    %v206 = vld [vmem:[#allocation5 + $0x520] sm:$0xff]
    %v207 = vld [vmem:[#allocation5 + $0x528] sm:$0xff]
    %v208 = vld [vmem:[#allocation5 + $0x530] sm:$0xff]
    %v209 = vld [vmem:[#allocation5 + $0x538] sm:$0xff]
    %v210 = vld [vmem:[#allocation5 + $0x540] sm:$0xff]
    %v211 = vld [vmem:[#allocation5 + $0x548] sm:$0xff]
    %v212 = vld [vmem:[#allocation5 + $0x550] sm:$0xff]
    %v213 = vld [vmem:[#allocation5 + $0x558] sm:$0xff]
    %v214 = vld [vmem:[#allocation5 + $0x560] sm:$0xff]
    %v215 = vld [vmem:[#allocation5 + $0x568] sm:$0xff]
    %v216 = vld [vmem:[#allocation5 + $0x570] sm:$0xff]
    %v217 = vld [vmem:[#allocation5 + $0x578] sm:$0xff]
    %v218 = vld [vmem:[#allocation5 + $0x580] sm:$0xff]
    %v219 = vld [vmem:[#allocation5 + $0x588] sm:$0xff]
    %v220 = vld [vmem:[#allocation5 + $0x590] sm:$0xff]
    %v221 = vld [vmem:[#allocation5 + $0x598] sm:$0xff]
    %v222 = vld [vmem:[#allocation5 + $0x5a0] sm:$0xff]
    %v223 = vld [vmem:[#allocation5 + $0x5a8] sm:$0xff]
    %v224 = vld [vmem:[#allocation5 + $0x5b0] sm:$0xff]
    %v225 = vld [vmem:[#allocation5 + $0x5b8] sm:$0xff]
    %v226 = vld [vmem:[#allocation5 + $0x5c0] sm:$0xff]
    %v227 = vld [vmem:[#allocation5 + $0x5c8] sm:$0xff]
    %v228 = vld [vmem:[#allocation5 + $0x5d0] sm:$0xff]
    %v229 = vld [vmem:[#allocation5 + $0x5d8] sm:$0xff]
    %v230 = vld [vmem:[#allocation5 + $0x5e0] sm:$0xff]
    %v231 = vld [vmem:[#allocation5 + $0x5e8] sm:$0xff]
    %v232 = vld [vmem:[#allocation5 + $0x5f0] sm:$0xff]
    %v233 = vld [vmem:[#allocation5 + $0x5f8] sm:$0xff]
    %v234 = vld [vmem:[#allocation5 + $0x600] sm:$0xff]
    %v235 = vld [vmem:[#allocation5 + $0x608] sm:$0xff]
    %v236 = vld [vmem:[#allocation5 + $0x610] sm:$0xff]
    %v237 = vld [vmem:[#allocation5 + $0x618] sm:$0xff]
    %v238 = vld [vmem:[#allocation5 + $0x620] sm:$0xff]
    %v239 = vld [vmem:[#allocation5 + $0x628] sm:$0xff]
    %v240 = vld [vmem:[#allocation5 + $0x630] sm:$0xff]
    %v241 = vld [vmem:[#allocation5 + $0x638] sm:$0xff]
    %v242 = vld [vmem:[#allocation5 + $0x640] sm:$0xff]
    %v243 = vld [vmem:[#allocation5 + $0x648] sm:$0xff]
    %v244 = vld [vmem:[#allocation5 + $0x650] sm:$0xff]
    %v245 = vld [vmem:[#allocation5 + $0x658] sm:$0xff]
    %v246 = vld [vmem:[#allocation5 + $0x660] sm:$0xff]
    %v247 = vld [vmem:[#allocation5 + $0x668] sm:$0xff]
    %v248 = vld [vmem:[#allocation5 + $0x670] sm:$0xff]
    %v249 = vld [vmem:[#allocation5 + $0x678] sm:$0xff]
    %v250 = vld [vmem:[#allocation5 + $0x680] sm:$0xff]
    %v251 = vld [vmem:[#allocation5 + $0x688] sm:$0xff]
    %v252 = vld [vmem:[#allocation5 + $0x690] sm:$0xff]
    %v253 = vld [vmem:[#allocation5 + $0x698] sm:$0xff]
    %v254 = vld [vmem:[#allocation5 + $0x6a0] sm:$0xff]
    %v255 = vld [vmem:[#allocation5 + $0x6a8] sm:$0xff]
    %v256 = vld [vmem:[#allocation5 + $0x6b0] sm:$0xff]
    %v257 = vld [vmem:[#allocation5 + $0x6b8] sm:$0xff]
    %v258 = vld [vmem:[#allocation5 + $0x6c0] sm:$0xff]
    %v259 = vld [vmem:[#allocation5 + $0x6c8] sm:$0xff]
    %v260 = vld [vmem:[#allocation5 + $0x6d0] sm:$0xff]
    %v261 = vld [vmem:[#allocation5 + $0x6d8] sm:$0xff]
    %v262 = vld [vmem:[#allocation5 + $0x6e0] sm:$0xff]
    %v263 = vld [vmem:[#allocation5 + $0x6e8] sm:$0xff]
    %v264 = vld [vmem:[#allocation5 + $0x6f0] sm:$0xff]
    %v265 = vld [vmem:[#allocation5 + $0x6f8] sm:$0xff]
    %v266 = vld [vmem:[#allocation5 + $0x700] sm:$0xff]
    %v267 = vld [vmem:[#allocation5 + $0x708] sm:$0xff]
    %v268 = vld [vmem:[#allocation5 + $0x710] sm:$0xff]
    %v269 = vld [vmem:[#allocation5 + $0x718] sm:$0xff]
    %v270 = vld [vmem:[#allocation5 + $0x720] sm:$0xff]
    %v271 = vld [vmem:[#allocation5 + $0x728] sm:$0xff]
    %v272 = vld [vmem:[#allocation5 + $0x730] sm:$0xff]
    %v273 = vld [vmem:[#allocation5 + $0x738] sm:$0xff]
    %v274 = vld [vmem:[#allocation5 + $0x740] sm:$0xff]
    %v275 = vld [vmem:[#allocation5 + $0x748] sm:$0xff]
    %v276 = vld [vmem:[#allocation5 + $0x750] sm:$0xff]
    %v277 = vld [vmem:[#allocation5 + $0x758] sm:$0xff]
    %v278 = vld [vmem:[#allocation5 + $0x760] sm:$0xff]
    %v279 = vld [vmem:[#allocation5 + $0x768] sm:$0xff]
    %v280 = vld [vmem:[#allocation5 + $0x770] sm:$0xff]
    %v281 = vld [vmem:[#allocation5 + $0x778] sm:$0xff]
    %v282 = vld [vmem:[#allocation5 + $0x780] sm:$0xff]
    %v283 = vld [vmem:[#allocation5 + $0x788] sm:$0xff]
    %v284 = vld [vmem:[#allocation5 + $0x790] sm:$0xff]
    %v285 = vld [vmem:[#allocation5 + $0x798] sm:$0xff]
    %v286 = vld [vmem:[#allocation5 + $0x7a0] sm:$0xff]
    %v287 = vld [vmem:[#allocation5 + $0x7a8] sm:$0xff]
    %v288 = vld [vmem:[#allocation5 + $0x7b0] sm:$0xff]
    %v289 = vld [vmem:[#allocation5 + $0x7b8] sm:$0xff]
    %v290 = vld [vmem:[#allocation5 + $0x7c0] sm:$0xff]
    %v291 = vld [vmem:[#allocation5 + $0x7c8] sm:$0xff]
    %v292 = vld [vmem:[#allocation5 + $0x7d0] sm:$0xff]
    %v293 = vld [vmem:[#allocation5 + $0x7d8] sm:$0xff]
    %v294 = vld [vmem:[#allocation5 + $0x7e0] sm:$0xff]
    %v295 = vld [vmem:[#allocation5 + $0x7e8] sm:$0xff]
    %v296 = vld [vmem:[#allocation5 + $0x7f0] sm:$0xff]
    %v297 = vld [vmem:[#allocation5 + $0x7f8] sm:$0xff]
    %v300 = vunpack.c.l.b16 %v40
    %v301 = vunpack.c.h.b16 %v40
    %v302 = vunpack.c.l.b16 %v41
    %v303 = vunpack.c.h.b16 %v41
    %v304 = vpack.c.b16 %v302, %v300
    %v305 = vpack.c.b16 %v303, %v301
    %v564 = vunpack.c.l.b16 %v42
    %v565 = vunpack.c.h.b16 %v42
    %v566 = vunpack.c.l.b16 %v43
    %v567 = vunpack.c.h.b16 %v43
    %v568 = vunpack.c.l.b16 %v44
    %v569 = vunpack.c.h.b16 %v44
    %v570 = vunpack.c.l.b16 %v45
    %v571 = vunpack.c.h.b16 %v45
    %v572 = vunpack.c.l.b16 %v46
    %v573 = vunpack.c.h.b16 %v46
    %v574 = vunpack.c.l.b16 %v47
    %v575 = vunpack.c.h.b16 %v47
    %v576 = vunpack.c.l.b16 %v48
    %v577 = vunpack.c.h.b16 %v48
    %v578 = vunpack.c.l.b16 %v49
    %v579 = vunpack.c.h.b16 %v49
    %v580 = vunpack.c.l.b16 %v50
    %v581 = vunpack.c.h.b16 %v50
    %v582 = vunpack.c.l.b16 %v51
    %v583 = vunpack.c.h.b16 %v51
    %v584 = vunpack.c.l.b16 %v52
    %v585 = vunpack.c.h.b16 %v52
    %v586 = vunpack.c.l.b16 %v53
    %v587 = vunpack.c.h.b16 %v53
    %v588 = vunpack.c.l.b16 %v54
    %v589 = vunpack.c.h.b16 %v54
    %v590 = vunpack.c.l.b16 %v55
    %v591 = vunpack.c.h.b16 %v55
    %v592 = vunpack.c.l.b16 %v56
    %v593 = vunpack.c.h.b16 %v56
    %v594 = vunpack.c.l.b16 %v57
    %v595 = vunpack.c.h.b16 %v57
    %v596 = vunpack.c.l.b16 %v58
    %v597 = vunpack.c.h.b16 %v58
    %v598 = vunpack.c.l.b16 %v59
    %v599 = vunpack.c.h.b16 %v59
    %v600 = vunpack.c.l.b16 %v60
    %v601 = vunpack.c.h.b16 %v60
    %v602 = vunpack.c.l.b16 %v61
    %v603 = vunpack.c.h.b16 %v61
    %v604 = vunpack.c.l.b16 %v62
    %v605 = vunpack.c.h.b16 %v62
    %v606 = vunpack.c.l.b16 %v63
    %v607 = vunpack.c.h.b16 %v63
    %v608 = vunpack.c.l.b16 %v64
    %v609 = vunpack.c.h.b16 %v64
    %v610 = vunpack.c.l.b16 %v65
    %v611 = vunpack.c.h.b16 %v65
    %v612 = vunpack.c.l.b16 %v66
    %v613 = vunpack.c.h.b16 %v66
    %v614 = vunpack.c.l.b16 %v67
    %v615 = vunpack.c.h.b16 %v67
    %v616 = vunpack.c.l.b16 %v68
    %v617 = vunpack.c.h.b16 %v68
    %v618 = vunpack.c.l.b16 %v69
    %v619 = vunpack.c.h.b16 %v69
    %v620 = vunpack.c.l.b16 %v70
    %v621 = vunpack.c.h.b16 %v70
    %v622 = vunpack.c.l.b16 %v71
    %v623 = vunpack.c.h.b16 %v71
    %v624 = vunpack.c.l.b16 %v72
    %v625 = vunpack.c.h.b16 %v72
    %v626 = vunpack.c.l.b16 %v73
    %v627 = vunpack.c.h.b16 %v73
    %v628 = vunpack.c.l.b16 %v74
    %v629 = vunpack.c.h.b16 %v74
    %v630 = vunpack.c.l.b16 %v75
    %v631 = vunpack.c.h.b16 %v75
    %v632 = vunpack.c.l.b16 %v76
    %v633 = vunpack.c.h.b16 %v76
    %v634 = vunpack.c.l.b16 %v77
    %v635 = vunpack.c.h.b16 %v77
    %v636 = vunpack.c.l.b16 %v78
    %v637 = vunpack.c.h.b16 %v78
    %v638 = vunpack.c.l.b16 %v79
    %v639 = vunpack.c.h.b16 %v79
    %v640 = vunpack.c.l.b16 %v80
    %v641 = vunpack.c.h.b16 %v80
    %v642 = vunpack.c.l.b16 %v81
    %v643 = vunpack.c.h.b16 %v81
    %v644 = vunpack.c.l.b16 %v82
    %v645 = vunpack.c.h.b16 %v82
    %v646 = vunpack.c.l.b16 %v83
    %v647 = vunpack.c.h.b16 %v83
    %v648 = vunpack.c.l.b16 %v84
    %v649 = vunpack.c.h.b16 %v84
    %v650 = vunpack.c.l.b16 %v85
    %v651 = vunpack.c.h.b16 %v85
    %v652 = vunpack.c.l.b16 %v86
    %v653 = vunpack.c.h.b16 %v86
    %v654 = vunpack.c.l.b16 %v87
    %v655 = vunpack.c.h.b16 %v87
    %v656 = vunpack.c.l.b16 %v88
    %v657 = vunpack.c.h.b16 %v88
    %v658 = vunpack.c.l.b16 %v89
    %v659 = vunpack.c.h.b16 %v89
    %v660 = vunpack.c.l.b16 %v90
    %v661 = vunpack.c.h.b16 %v90
    %v662 = vunpack.c.l.b16 %v91
    %v663 = vunpack.c.h.b16 %v91
    %v664 = vunpack.c.l.b16 %v92
    %v665 = vunpack.c.h.b16 %v92
    %v666 = vunpack.c.l.b16 %v93
    %v667 = vunpack.c.h.b16 %v93
    %v668 = vunpack.c.l.b16 %v94
    %v669 = vunpack.c.h.b16 %v94
    %v670 = vunpack.c.l.b16 %v95
    %v671 = vunpack.c.h.b16 %v95
    %v672 = vunpack.c.l.b16 %v96
    %v673 = vunpack.c.h.b16 %v96
    %v674 = vunpack.c.l.b16 %v97
    %v675 = vunpack.c.h.b16 %v97
    %v676 = vunpack.c.l.b16 %v98
    %v677 = vunpack.c.h.b16 %v98
    %v678 = vunpack.c.l.b16 %v99
    %v679 = vunpack.c.h.b16 %v99
    %v680 = vunpack.c.l.b16 %v100
    %v681 = vunpack.c.h.b16 %v100
    %v682 = vunpack.c.l.b16 %v101
    %v683 = vunpack.c.h.b16 %v101
    %v684 = vunpack.c.l.b16 %v102
    %v685 = vunpack.c.h.b16 %v102
    %v686 = vunpack.c.l.b16 %v103
    %v687 = vunpack.c.h.b16 %v103
    %v688 = vunpack.c.l.b16 %v104
    %v689 = vunpack.c.h.b16 %v104
    %v690 = vunpack.c.l.b16 %v105
    %v691 = vunpack.c.h.b16 %v105
    %v692 = vunpack.c.l.b16 %v106
    %v693 = vunpack.c.h.b16 %v106
    %v694 = vunpack.c.l.b16 %v107
    %v695 = vunpack.c.h.b16 %v107
    %v696 = vunpack.c.l.b16 %v108
    %v697 = vunpack.c.h.b16 %v108
    %v698 = vunpack.c.l.b16 %v109
    %v699 = vunpack.c.h.b16 %v109
    %v700 = vunpack.c.l.b16 %v110
    %v701 = vunpack.c.h.b16 %v110
    %v702 = vunpack.c.l.b16 %v111
    %v703 = vunpack.c.h.b16 %v111
    %v704 = vunpack.c.l.b16 %v112
    %v705 = vunpack.c.h.b16 %v112
    %v706 = vunpack.c.l.b16 %v113
    %v707 = vunpack.c.h.b16 %v113
    %v708 = vunpack.c.l.b16 %v114
    %v709 = vunpack.c.h.b16 %v114
    %v710 = vunpack.c.l.b16 %v115
    %v711 = vunpack.c.h.b16 %v115
    %v712 = vunpack.c.l.b16 %v116
    %v713 = vunpack.c.h.b16 %v116
    %v714 = vunpack.c.l.b16 %v117
    %v715 = vunpack.c.h.b16 %v117
    %v716 = vunpack.c.l.b16 %v118
    %v717 = vunpack.c.h.b16 %v118
    %v718 = vunpack.c.l.b16 %v119
    %v719 = vunpack.c.h.b16 %v119
    %v720 = vunpack.c.l.b16 %v120
    %v721 = vunpack.c.h.b16 %v120
    %v722 = vunpack.c.l.b16 %v121
    %v723 = vunpack.c.h.b16 %v121
    %v724 = vunpack.c.l.b16 %v122
    %v725 = vunpack.c.h.b16 %v122
    %v726 = vunpack.c.l.b16 %v123
    %v727 = vunpack.c.h.b16 %v123
    %v728 = vunpack.c.l.b16 %v124
    %v729 = vunpack.c.h.b16 %v124
    %v730 = vunpack.c.l.b16 %v125
    %v731 = vunpack.c.h.b16 %v125
    %v732 = vunpack.c.l.b16 %v126
    %v733 = vunpack.c.h.b16 %v126
    %v734 = vunpack.c.l.b16 %v127
    %v735 = vunpack.c.h.b16 %v127
    %v736 = vunpack.c.l.b16 %v128
    %v737 = vunpack.c.h.b16 %v128
    %v738 = vunpack.c.l.b16 %v129
    %v739 = vunpack.c.h.b16 %v129
    %v740 = vunpack.c.l.b16 %v130
    %v741 = vunpack.c.h.b16 %v130
    %v742 = vunpack.c.l.b16 %v131
    %v743 = vunpack.c.h.b16 %v131
    %v744 = vunpack.c.l.b16 %v132
    %v745 = vunpack.c.h.b16 %v132
    %v746 = vunpack.c.l.b16 %v133
    %v747 = vunpack.c.h.b16 %v133
    %v748 = vunpack.c.l.b16 %v134
    %v749 = vunpack.c.h.b16 %v134
    %v750 = vunpack.c.l.b16 %v135
    %v751 = vunpack.c.h.b16 %v135
    %v752 = vunpack.c.l.b16 %v136
    %v753 = vunpack.c.h.b16 %v136
    %v754 = vunpack.c.l.b16 %v137
    %v755 = vunpack.c.h.b16 %v137
    %v756 = vunpack.c.l.b16 %v138
    %v757 = vunpack.c.h.b16 %v138
    %v758 = vunpack.c.l.b16 %v139
    %v759 = vunpack.c.h.b16 %v139
    %v760 = vunpack.c.l.b16 %v140
    %v761 = vunpack.c.h.b16 %v140
    %v762 = vunpack.c.l.b16 %v141
    %v763 = vunpack.c.h.b16 %v141
    %v764 = vunpack.c.l.b16 %v142
    %v765 = vunpack.c.h.b16 %v142
    %v766 = vunpack.c.l.b16 %v143
    %v767 = vunpack.c.h.b16 %v143
    %v768 = vunpack.c.l.b16 %v144
    %v769 = vunpack.c.h.b16 %v144
    %v770 = vunpack.c.l.b16 %v145
    %v771 = vunpack.c.h.b16 %v145
    %v772 = vunpack.c.l.b16 %v146
    %v773 = vunpack.c.h.b16 %v146
    %v774 = vunpack.c.l.b16 %v147
    %v775 = vunpack.c.h.b16 %v147
    %v776 = vunpack.c.l.b16 %v148
    %v777 = vunpack.c.h.b16 %v148
    %v778 = vunpack.c.l.b16 %v149
    %v779 = vunpack.c.h.b16 %v149
    %v780 = vunpack.c.l.b16 %v150
    %v781 = vunpack.c.h.b16 %v150
    %v782 = vunpack.c.l.b16 %v151
    %v783 = vunpack.c.h.b16 %v151
    %v784 = vunpack.c.l.b16 %v152
    %v785 = vunpack.c.h.b16 %v152
    %v786 = vunpack.c.l.b16 %v153
    %v787 = vunpack.c.h.b16 %v153
    %v788 = vunpack.c.l.b16 %v154
    %v789 = vunpack.c.h.b16 %v154
    %v790 = vunpack.c.l.b16 %v155
    %v791 = vunpack.c.h.b16 %v155
    %v792 = vunpack.c.l.b16 %v156
    %v793 = vunpack.c.h.b16 %v156
    %v794 = vunpack.c.l.b16 %v157
    %v795 = vunpack.c.h.b16 %v157
    %v796 = vunpack.c.l.b16 %v158
    %v797 = vunpack.c.h.b16 %v158
    %v798 = vunpack.c.l.b16 %v159
    %v799 = vunpack.c.h.b16 %v159
    %v800 = vunpack.c.l.b16 %v160
    %v801 = vunpack.c.h.b16 %v160
    %v802 = vunpack.c.l.b16 %v161
    %v803 = vunpack.c.h.b16 %v161
    %v804 = vunpack.c.l.b16 %v162
    %v805 = vunpack.c.h.b16 %v162
    %v806 = vunpack.c.l.b16 %v163
    %v807 = vunpack.c.h.b16 %v163
    %v808 = vunpack.c.l.b16 %v164
    %v809 = vunpack.c.h.b16 %v164
    %v810 = vunpack.c.l.b16 %v165
    %v811 = vunpack.c.h.b16 %v165
    %v812 = vunpack.c.l.b16 %v166
    %v813 = vunpack.c.h.b16 %v166
    %v814 = vunpack.c.l.b16 %v167
    %v815 = vunpack.c.h.b16 %v167
    %v816 = vunpack.c.l.b16 %v168
    %v817 = vunpack.c.h.b16 %v168
    %v818 = vunpack.c.l.b16 %v169
    %v819 = vunpack.c.h.b16 %v169
    %v820 = vunpack.c.l.b16 %v170
    %v821 = vunpack.c.h.b16 %v170
    %v822 = vunpack.c.l.b16 %v171
    %v823 = vunpack.c.h.b16 %v171
    %v824 = vunpack.c.l.b16 %v172
    %v825 = vunpack.c.h.b16 %v172
    %v826 = vunpack.c.l.b16 %v173
    %v827 = vunpack.c.h.b16 %v173
    %v828 = vunpack.c.l.b16 %v174
    %v829 = vunpack.c.h.b16 %v174
    %v830 = vunpack.c.l.b16 %v175
    %v831 = vunpack.c.h.b16 %v175
    %v832 = vunpack.c.l.b16 %v176
    %v833 = vunpack.c.h.b16 %v176
    %v834 = vunpack.c.l.b16 %v177
    %v835 = vunpack.c.h.b16 %v177
    %v836 = vunpack.c.l.b16 %v178
    %v837 = vunpack.c.h.b16 %v178
    %v838 = vunpack.c.l.b16 %v179
    %v839 = vunpack.c.h.b16 %v179
    %v840 = vunpack.c.l.b16 %v180
    %v841 = vunpack.c.h.b16 %v180
    %v842 = vunpack.c.l.b16 %v181
    %v843 = vunpack.c.h.b16 %v181
    %v844 = vunpack.c.l.b16 %v182
    %v845 = vunpack.c.h.b16 %v182
    %v846 = vunpack.c.l.b16 %v183
    %v847 = vunpack.c.h.b16 %v183
    %v848 = vunpack.c.l.b16 %v184
    %v849 = vunpack.c.h.b16 %v184
    %v850 = vunpack.c.l.b16 %v185
    %v851 = vunpack.c.h.b16 %v185
    %v852 = vunpack.c.l.b16 %v186
    %v853 = vunpack.c.h.b16 %v186
    %v854 = vunpack.c.l.b16 %v187
    %v855 = vunpack.c.h.b16 %v187
    %v856 = vunpack.c.l.b16 %v188
    %v857 = vunpack.c.h.b16 %v188
    %v858 = vunpack.c.l.b16 %v189
    %v859 = vunpack.c.h.b16 %v189
    %v860 = vunpack.c.l.b16 %v190
    %v861 = vunpack.c.h.b16 %v190
    %v862 = vunpack.c.l.b16 %v191
    %v863 = vunpack.c.h.b16 %v191
    %v864 = vunpack.c.l.b16 %v192
    %v865 = vunpack.c.h.b16 %v192
    %v866 = vunpack.c.l.b16 %v193
    %v867 = vunpack.c.h.b16 %v193
    %v868 = vunpack.c.l.b16 %v194
    %v869 = vunpack.c.h.b16 %v194
    %v870 = vunpack.c.l.b16 %v195
    %v871 = vunpack.c.h.b16 %v195
    %v872 = vunpack.c.l.b16 %v196
    %v873 = vunpack.c.h.b16 %v196
    %v874 = vunpack.c.l.b16 %v197
    %v875 = vunpack.c.h.b16 %v197
    %v876 = vunpack.c.l.b16 %v198
    %v877 = vunpack.c.h.b16 %v198
    %v878 = vunpack.c.l.b16 %v199
    %v879 = vunpack.c.h.b16 %v199
    %v880 = vunpack.c.l.b16 %v200
    %v881 = vunpack.c.h.b16 %v200
    %v882 = vunpack.c.l.b16 %v201
    %v883 = vunpack.c.h.b16 %v201
    %v884 = vunpack.c.l.b16 %v202
    %v885 = vunpack.c.h.b16 %v202
    %v886 = vunpack.c.l.b16 %v203
    %v887 = vunpack.c.h.b16 %v203
    %v888 = vunpack.c.l.b16 %v204
    %v889 = vunpack.c.h.b16 %v204
    %v890 = vunpack.c.l.b16 %v205
    %v891 = vunpack.c.h.b16 %v205
    %v892 = vunpack.c.l.b16 %v206
    %v893 = vunpack.c.h.b16 %v206
    %v894 = vunpack.c.l.b16 %v207
    %v895 = vunpack.c.h.b16 %v207
    %v896 = vunpack.c.l.b16 %v208
    %v897 = vunpack.c.h.b16 %v208
    %v898 = vunpack.c.l.b16 %v209
    %v899 = vunpack.c.h.b16 %v209
    %v900 = vunpack.c.l.b16 %v210
    %v901 = vunpack.c.h.b16 %v210
    %v902 = vunpack.c.l.b16 %v211
    %v903 = vunpack.c.h.b16 %v211
    %v904 = vunpack.c.l.b16 %v212
    %v905 = vunpack.c.h.b16 %v212
    %v906 = vunpack.c.l.b16 %v213
    %v907 = vunpack.c.h.b16 %v213
    %v908 = vunpack.c.l.b16 %v214
    %v909 = vunpack.c.h.b16 %v214
    %v910 = vunpack.c.l.b16 %v215
    %v911 = vunpack.c.h.b16 %v215
    %v912 = vunpack.c.l.b16 %v216
    %v913 = vunpack.c.h.b16 %v216
    %v914 = vunpack.c.l.b16 %v217
    %v915 = vunpack.c.h.b16 %v217
    %v916 = vunpack.c.l.b16 %v218
    %v917 = vunpack.c.h.b16 %v218
    %v918 = vunpack.c.l.b16 %v219
    %v919 = vunpack.c.h.b16 %v219
    %v920 = vunpack.c.l.b16 %v220
    %v921 = vunpack.c.h.b16 %v220
    %v922 = vunpack.c.l.b16 %v221
    %v923 = vunpack.c.h.b16 %v221
    %v924 = vunpack.c.l.b16 %v222
    %v925 = vunpack.c.h.b16 %v222
    %v926 = vunpack.c.l.b16 %v223
    %v927 = vunpack.c.h.b16 %v223
    %v928 = vunpack.c.l.b16 %v224
    %v929 = vunpack.c.h.b16 %v224
    %v930 = vunpack.c.l.b16 %v225
    %v931 = vunpack.c.h.b16 %v225
    %v932 = vunpack.c.l.b16 %v226
    %v933 = vunpack.c.h.b16 %v226
    %v934 = vunpack.c.l.b16 %v227
    %v935 = vunpack.c.h.b16 %v227
    %v936 = vunpack.c.l.b16 %v228
    %v937 = vunpack.c.h.b16 %v228
    %v938 = vunpack.c.l.b16 %v229
    %v939 = vunpack.c.h.b16 %v229
    %v940 = vunpack.c.l.b16 %v230
    %v941 = vunpack.c.h.b16 %v230
    %v942 = vunpack.c.l.b16 %v231
    %v943 = vunpack.c.h.b16 %v231
    %v944 = vunpack.c.l.b16 %v232
    %v945 = vunpack.c.h.b16 %v232
    %v946 = vunpack.c.l.b16 %v233
    %v947 = vunpack.c.h.b16 %v233
    %v948 = vunpack.c.l.b16 %v234
    %v949 = vunpack.c.h.b16 %v234
    %v950 = vunpack.c.l.b16 %v235
    %v951 = vunpack.c.h.b16 %v235
    %v952 = vunpack.c.l.b16 %v236
    %v953 = vunpack.c.h.b16 %v236
    %v954 = vunpack.c.l.b16 %v237
    %v955 = vunpack.c.h.b16 %v237
    %v956 = vunpack.c.l.b16 %v238
    %v957 = vunpack.c.h.b16 %v238
    %v958 = vunpack.c.l.b16 %v239
    %v959 = vunpack.c.h.b16 %v239
    %v960 = vunpack.c.l.b16 %v240
    %v961 = vunpack.c.h.b16 %v240
    %v962 = vunpack.c.l.b16 %v241
    %v963 = vunpack.c.h.b16 %v241
    %v964 = vunpack.c.l.b16 %v242
    %v965 = vunpack.c.h.b16 %v242
    %v966 = vunpack.c.l.b16 %v243
    %v967 = vunpack.c.h.b16 %v243
    %v968 = vunpack.c.l.b16 %v244
    %v969 = vunpack.c.h.b16 %v244
    %v970 = vunpack.c.l.b16 %v245
    %v971 = vunpack.c.h.b16 %v245
    %v972 = vunpack.c.l.b16 %v246
    %v973 = vunpack.c.h.b16 %v246
    %v974 = vunpack.c.l.b16 %v247
    %v975 = vunpack.c.h.b16 %v247
    %v976 = vunpack.c.l.b16 %v248
    %v977 = vunpack.c.h.b16 %v248
    %v978 = vunpack.c.l.b16 %v249
    %v979 = vunpack.c.h.b16 %v249
    %v980 = vunpack.c.l.b16 %v250
    %v981 = vunpack.c.h.b16 %v250
    %v982 = vunpack.c.l.b16 %v251
    %v983 = vunpack.c.h.b16 %v251
    %v984 = vunpack.c.l.b16 %v252
    %v985 = vunpack.c.h.b16 %v252
    %v986 = vunpack.c.l.b16 %v253
    %v987 = vunpack.c.h.b16 %v253
    %v988 = vunpack.c.l.b16 %v254
    %v989 = vunpack.c.h.b16 %v254
    %v990 = vunpack.c.l.b16 %v255
    %v991 = vunpack.c.h.b16 %v255
    %v992 = vunpack.c.l.b16 %v256
    %v993 = vunpack.c.h.b16 %v256
    %v994 = vunpack.c.l.b16 %v257
    %v995 = vunpack.c.h.b16 %v257
    %v996 = vunpack.c.l.b16 %v258
    %v997 = vunpack.c.h.b16 %v258
    %v998 = vunpack.c.l.b16 %v259
    %v999 = vunpack.c.h.b16 %v259
    %v1000 = vunpack.c.l.b16 %v260
    %v1001 = vunpack.c.h.b16 %v260
    %v1002 = vunpack.c.l.b16 %v261
    %v1003 = vunpack.c.h.b16 %v261
    %v1004 = vunpack.c.l.b16 %v262
    %v1005 = vunpack.c.h.b16 %v262
    %v1006 = vunpack.c.l.b16 %v263
    %v1007 = vunpack.c.h.b16 %v263
    %v1008 = vunpack.c.l.b16 %v264
    %v1009 = vunpack.c.h.b16 %v264
    %v1010 = vunpack.c.l.b16 %v265
    %v1011 = vunpack.c.h.b16 %v265
    %v1012 = vunpack.c.l.b16 %v266
    %v1013 = vunpack.c.h.b16 %v266
    %v1014 = vunpack.c.l.b16 %v267
    %v1015 = vunpack.c.h.b16 %v267
    %v1016 = vunpack.c.l.b16 %v268
    %v1017 = vunpack.c.h.b16 %v268
    %v1018 = vunpack.c.l.b16 %v269
    %v1019 = vunpack.c.h.b16 %v269
    %v1020 = vunpack.c.l.b16 %v270
    %v1021 = vunpack.c.h.b16 %v270
    %v1022 = vunpack.c.l.b16 %v271
    %v1023 = vunpack.c.h.b16 %v271
    %v1024 = vunpack.c.l.b16 %v272
    %v1025 = vunpack.c.h.b16 %v272
    %v1026 = vunpack.c.l.b16 %v273
    %v1027 = vunpack.c.h.b16 %v273
    %v1028 = vunpack.c.l.b16 %v274
    %v1029 = vunpack.c.h.b16 %v274
    %v1030 = vunpack.c.l.b16 %v275
    %v1031 = vunpack.c.h.b16 %v275
    %v1032 = vunpack.c.l.b16 %v276
    %v1033 = vunpack.c.h.b16 %v276
    %v1034 = vunpack.c.l.b16 %v277
    %v1035 = vunpack.c.h.b16 %v277
    %v1036 = vunpack.c.l.b16 %v278
    %v1037 = vunpack.c.h.b16 %v278
    %v1038 = vunpack.c.l.b16 %v279
    %v1039 = vunpack.c.h.b16 %v279
    %v1040 = vunpack.c.l.b16 %v280
    %v1041 = vunpack.c.h.b16 %v280
    %v1042 = vunpack.c.l.b16 %v281
    %v1043 = vunpack.c.h.b16 %v281
    %v1044 = vunpack.c.l.b16 %v282
    %v1045 = vunpack.c.h.b16 %v282
    %v1046 = vunpack.c.l.b16 %v283
    %v1047 = vunpack.c.h.b16 %v283
    %v1048 = vunpack.c.l.b16 %v284
    %v1049 = vunpack.c.h.b16 %v284
    %v1050 = vunpack.c.l.b16 %v285
    %v1051 = vunpack.c.h.b16 %v285
    %v1052 = vunpack.c.l.b16 %v286
    %v1053 = vunpack.c.h.b16 %v286
    %v1054 = vunpack.c.l.b16 %v287
    %v1055 = vunpack.c.h.b16 %v287
    %v1056 = vunpack.c.l.b16 %v288
    %v1057 = vunpack.c.h.b16 %v288
    %v1058 = vunpack.c.l.b16 %v289
    %v1059 = vunpack.c.h.b16 %v289
    %v1060 = vunpack.c.l.b16 %v290
    %v1061 = vunpack.c.h.b16 %v290
    %v1062 = vunpack.c.l.b16 %v291
    %v1063 = vunpack.c.h.b16 %v291
    %v1064 = vunpack.c.l.b16 %v292
    %v1065 = vunpack.c.h.b16 %v292
    %v1066 = vunpack.c.l.b16 %v293
    %v1067 = vunpack.c.h.b16 %v293
    %v1068 = vunpack.c.l.b16 %v294
    %v1069 = vunpack.c.h.b16 %v294
    %v1070 = vunpack.c.l.b16 %v295
    %v1071 = vunpack.c.h.b16 %v295
    %v1072 = vunpack.c.l.b16 %v296
    %v1073 = vunpack.c.h.b16 %v296
    %v1074 = vunpack.c.l.b16 %v297
    %v1075 = vunpack.c.h.b16 %v297
    %v1076 = vpack.c.b16 %v580, %v564
    %v1077 = vpack.c.b16 %v581, %v565
    %v1078 = vpack.c.b16 %v582, %v566
    %v1079 = vpack.c.b16 %v583, %v567
    %v1080 = vpack.c.b16 %v584, %v568
    %v1081 = vpack.c.b16 %v585, %v569
    %v1082 = vpack.c.b16 %v586, %v570
    %v1083 = vpack.c.b16 %v587, %v571
    %v1084 = vpack.c.b16 %v588, %v572
    %v1085 = vpack.c.b16 %v589, %v573
    %v1086 = vpack.c.b16 %v590, %v574
    %v1087 = vpack.c.b16 %v591, %v575
    %v1088 = vpack.c.b16 %v592, %v576
    %v1089 = vpack.c.b16 %v593, %v577
    %v1090 = vpack.c.b16 %v594, %v578
    %v1091 = vpack.c.b16 %v595, %v579
    %v1092 = vpack.c.b16 %v612, %v596
    %v1093 = vpack.c.b16 %v613, %v597
    %v1094 = vpack.c.b16 %v614, %v598
    %v1095 = vpack.c.b16 %v615, %v599
    %v1096 = vpack.c.b16 %v616, %v600
    %v1097 = vpack.c.b16 %v617, %v601
    %v1098 = vpack.c.b16 %v618, %v602
    %v1099 = vpack.c.b16 %v619, %v603
    %v1100 = vpack.c.b16 %v620, %v604
    %v1101 = vpack.c.b16 %v621, %v605
    %v1102 = vpack.c.b16 %v622, %v606
    %v1103 = vpack.c.b16 %v623, %v607
    %v1104 = vpack.c.b16 %v624, %v608
    %v1105 = vpack.c.b16 %v625, %v609
    %v1106 = vpack.c.b16 %v626, %v610
    %v1107 = vpack.c.b16 %v627, %v611
    %v1108 = vpack.c.b16 %v644, %v628
    %v1109 = vpack.c.b16 %v645, %v629
    %v1110 = vpack.c.b16 %v646, %v630
    %v1111 = vpack.c.b16 %v647, %v631
    %v1112 = vpack.c.b16 %v648, %v632
    %v1113 = vpack.c.b16 %v649, %v633
    %v1114 = vpack.c.b16 %v650, %v634
    %v1115 = vpack.c.b16 %v651, %v635
    %v1116 = vpack.c.b16 %v652, %v636
    %v1117 = vpack.c.b16 %v653, %v637
    %v1118 = vpack.c.b16 %v654, %v638
    %v1119 = vpack.c.b16 %v655, %v639
    %v1120 = vpack.c.b16 %v656, %v640
    %v1121 = vpack.c.b16 %v657, %v641
    %v1122 = vpack.c.b16 %v658, %v642
    %v1123 = vpack.c.b16 %v659, %v643
    %v1124 = vpack.c.b16 %v676, %v660
    %v1125 = vpack.c.b16 %v677, %v661
    %v1126 = vpack.c.b16 %v678, %v662
    %v1127 = vpack.c.b16 %v679, %v663
    %v1128 = vpack.c.b16 %v680, %v664
    %v1129 = vpack.c.b16 %v681, %v665
    %v1130 = vpack.c.b16 %v682, %v666
    %v1131 = vpack.c.b16 %v683, %v667
    %v1132 = vpack.c.b16 %v684, %v668
    %v1133 = vpack.c.b16 %v685, %v669
    %v1134 = vpack.c.b16 %v686, %v670
    %v1135 = vpack.c.b16 %v687, %v671
    %v1136 = vpack.c.b16 %v688, %v672
    %v1137 = vpack.c.b16 %v689, %v673
    %v1138 = vpack.c.b16 %v690, %v674
    %v1139 = vpack.c.b16 %v691, %v675
    %v1140 = vpack.c.b16 %v708, %v692
    %v1141 = vpack.c.b16 %v709, %v693
    %v1142 = vpack.c.b16 %v710, %v694
    %v1143 = vpack.c.b16 %v711, %v695
    %v1144 = vpack.c.b16 %v712, %v696
    %v1145 = vpack.c.b16 %v713, %v697
    %v1146 = vpack.c.b16 %v714, %v698
    %v1147 = vpack.c.b16 %v715, %v699
    %v1148 = vpack.c.b16 %v716, %v700
    %v1149 = vpack.c.b16 %v717, %v701
    %v1150 = vpack.c.b16 %v718, %v702
    %v1151 = vpack.c.b16 %v719, %v703
    %v1152 = vpack.c.b16 %v720, %v704
    %v1153 = vpack.c.b16 %v721, %v705
    %v1154 = vpack.c.b16 %v722, %v706
    %v1155 = vpack.c.b16 %v723, %v707
    %v1156 = vpack.c.b16 %v740, %v724
    %v1157 = vpack.c.b16 %v741, %v725
    %v1158 = vpack.c.b16 %v742, %v726
    %v1159 = vpack.c.b16 %v743, %v727
    %v1160 = vpack.c.b16 %v744, %v728
    %v1161 = vpack.c.b16 %v745, %v729
    %v1162 = vpack.c.b16 %v746, %v730
    %v1163 = vpack.c.b16 %v747, %v731
    %v1164 = vpack.c.b16 %v748, %v732
    %v1165 = vpack.c.b16 %v749, %v733
    %v1166 = vpack.c.b16 %v750, %v734
    %v1167 = vpack.c.b16 %v751, %v735
    %v1168 = vpack.c.b16 %v752, %v736
    %v1169 = vpack.c.b16 %v753, %v737
    %v1170 = vpack.c.b16 %v754, %v738
    %v1171 = vpack.c.b16 %v755, %v739
    %v1172 = vpack.c.b16 %v772, %v756
    %v1173 = vpack.c.b16 %v773, %v757
    %v1174 = vpack.c.b16 %v774, %v758
    %v1175 = vpack.c.b16 %v775, %v759
    %v1176 = vpack.c.b16 %v776, %v760
    %v1177 = vpack.c.b16 %v777, %v761
    %v1178 = vpack.c.b16 %v778, %v762
    %v1179 = vpack.c.b16 %v779, %v763
    %v1180 = vpack.c.b16 %v780, %v764
    %v1181 = vpack.c.b16 %v781, %v765
    %v1182 = vpack.c.b16 %v782, %v766
    %v1183 = vpack.c.b16 %v783, %v767
    %v1184 = vpack.c.b16 %v784, %v768
    %v1185 = vpack.c.b16 %v785, %v769
    %v1186 = vpack.c.b16 %v786, %v770
    %v1187 = vpack.c.b16 %v787, %v771
    %v1188 = vpack.c.b16 %v804, %v788
    %v1189 = vpack.c.b16 %v805, %v789
    %v1190 = vpack.c.b16 %v806, %v790
    %v1191 = vpack.c.b16 %v807, %v791
    %v1192 = vpack.c.b16 %v808, %v792
    %v1193 = vpack.c.b16 %v809, %v793
    %v1194 = vpack.c.b16 %v810, %v794
    %v1195 = vpack.c.b16 %v811, %v795
    %v1196 = vpack.c.b16 %v812, %v796
    %v1197 = vpack.c.b16 %v813, %v797
    %v1198 = vpack.c.b16 %v814, %v798
    %v1199 = vpack.c.b16 %v815, %v799
    %v1200 = vpack.c.b16 %v816, %v800
    %v1201 = vpack.c.b16 %v817, %v801
    %v1202 = vpack.c.b16 %v818, %v802
    %v1203 = vpack.c.b16 %v819, %v803
    %v1204 = vpack.c.b16 %v836, %v820
    %v1205 = vpack.c.b16 %v837, %v821
    %v1206 = vpack.c.b16 %v838, %v822
    %v1207 = vpack.c.b16 %v839, %v823
    %v1208 = vpack.c.b16 %v840, %v824
    %v1209 = vpack.c.b16 %v841, %v825
    %v1210 = vpack.c.b16 %v842, %v826
    %v1211 = vpack.c.b16 %v843, %v827
    %v1212 = vpack.c.b16 %v844, %v828
    %v1213 = vpack.c.b16 %v845, %v829
    %v1214 = vpack.c.b16 %v846, %v830
    %v1215 = vpack.c.b16 %v847, %v831
    %v1216 = vpack.c.b16 %v848, %v832
    %v1217 = vpack.c.b16 %v849, %v833
    %v1218 = vpack.c.b16 %v850, %v834
    %v1219 = vpack.c.b16 %v851, %v835
    %v1220 = vpack.c.b16 %v868, %v852
    %v1221 = vpack.c.b16 %v869, %v853
    %v1222 = vpack.c.b16 %v870, %v854
    %v1223 = vpack.c.b16 %v871, %v855
    %v1224 = vpack.c.b16 %v872, %v856
    %v1225 = vpack.c.b16 %v873, %v857
    %v1226 = vpack.c.b16 %v874, %v858
    %v1227 = vpack.c.b16 %v875, %v859
    %v1228 = vpack.c.b16 %v876, %v860
    %v1229 = vpack.c.b16 %v877, %v861
    %v1230 = vpack.c.b16 %v878, %v862
    %v1231 = vpack.c.b16 %v879, %v863
    %v1232 = vpack.c.b16 %v880, %v864
    %v1233 = vpack.c.b16 %v881, %v865
    %v1234 = vpack.c.b16 %v882, %v866
    %v1235 = vpack.c.b16 %v883, %v867
    %v1236 = vpack.c.b16 %v900, %v884
    %v1237 = vpack.c.b16 %v901, %v885
    %v1238 = vpack.c.b16 %v902, %v886
    %v1239 = vpack.c.b16 %v903, %v887
    %v1240 = vpack.c.b16 %v904, %v888
    %v1241 = vpack.c.b16 %v905, %v889
    %v1242 = vpack.c.b16 %v906, %v890
    %v1243 = vpack.c.b16 %v907, %v891
    %v1244 = vpack.c.b16 %v908, %v892
    %v1245 = vpack.c.b16 %v909, %v893
    %v1246 = vpack.c.b16 %v910, %v894
    %v1247 = vpack.c.b16 %v911, %v895
    %v1248 = vpack.c.b16 %v912, %v896
    %v1249 = vpack.c.b16 %v913, %v897
    %v1250 = vpack.c.b16 %v914, %v898
    %v1251 = vpack.c.b16 %v915, %v899
    %v1252 = vpack.c.b16 %v932, %v916
    %v1253 = vpack.c.b16 %v933, %v917
    %v1254 = vpack.c.b16 %v934, %v918
    %v1255 = vpack.c.b16 %v935, %v919
    %v1256 = vpack.c.b16 %v936, %v920
    %v1257 = vpack.c.b16 %v937, %v921
    %v1258 = vpack.c.b16 %v938, %v922
    %v1259 = vpack.c.b16 %v939, %v923
    %v1260 = vpack.c.b16 %v940, %v924
    %v1261 = vpack.c.b16 %v941, %v925
    %v1262 = vpack.c.b16 %v942, %v926
    %v1263 = vpack.c.b16 %v943, %v927
    %v1264 = vpack.c.b16 %v944, %v928
    %v1265 = vpack.c.b16 %v945, %v929
    %v1266 = vpack.c.b16 %v946, %v930
    %v1267 = vpack.c.b16 %v947, %v931
    %v1268 = vpack.c.b16 %v964, %v948
    %v1269 = vpack.c.b16 %v965, %v949
    %v1270 = vpack.c.b16 %v966, %v950
    %v1271 = vpack.c.b16 %v967, %v951
    %v1272 = vpack.c.b16 %v968, %v952
    %v1273 = vpack.c.b16 %v969, %v953
    %v1274 = vpack.c.b16 %v970, %v954
    %v1275 = vpack.c.b16 %v971, %v955
    %v1276 = vpack.c.b16 %v972, %v956
    %v1277 = vpack.c.b16 %v973, %v957
    %v1278 = vpack.c.b16 %v974, %v958
    %v1279 = vpack.c.b16 %v975, %v959
    %v1280 = vpack.c.b16 %v976, %v960
    %v1281 = vpack.c.b16 %v977, %v961
    %v1282 = vpack.c.b16 %v978, %v962
    %v1283 = vpack.c.b16 %v979, %v963
    %v1284 = vpack.c.b16 %v996, %v980
    %v1285 = vpack.c.b16 %v997, %v981
    %v1286 = vpack.c.b16 %v998, %v982
    %v1287 = vpack.c.b16 %v999, %v983
    %v1288 = vpack.c.b16 %v1000, %v984
    %v1289 = vpack.c.b16 %v1001, %v985
    %v1290 = vpack.c.b16 %v1002, %v986
    %v1291 = vpack.c.b16 %v1003, %v987
    %v1292 = vpack.c.b16 %v1004, %v988
    %v1293 = vpack.c.b16 %v1005, %v989
    %v1294 = vpack.c.b16 %v1006, %v990
    %v1295 = vpack.c.b16 %v1007, %v991
    %v1296 = vpack.c.b16 %v1008, %v992
    %v1297 = vpack.c.b16 %v1009, %v993
    %v1298 = vpack.c.b16 %v1010, %v994
    %v1299 = vpack.c.b16 %v1011, %v995
    %v1300 = vpack.c.b16 %v1028, %v1012
    %v1301 = vpack.c.b16 %v1029, %v1013
    %v1302 = vpack.c.b16 %v1030, %v1014
    %v1303 = vpack.c.b16 %v1031, %v1015
    %v1304 = vpack.c.b16 %v1032, %v1016
    %v1305 = vpack.c.b16 %v1033, %v1017
    %v1306 = vpack.c.b16 %v1034, %v1018
    %v1307 = vpack.c.b16 %v1035, %v1019
    %v1308 = vpack.c.b16 %v1036, %v1020
    %v1309 = vpack.c.b16 %v1037, %v1021
    %v1310 = vpack.c.b16 %v1038, %v1022
    %v1311 = vpack.c.b16 %v1039, %v1023
    %v1312 = vpack.c.b16 %v1040, %v1024
    %v1313 = vpack.c.b16 %v1041, %v1025
    %v1314 = vpack.c.b16 %v1042, %v1026
    %v1315 = vpack.c.b16 %v1043, %v1027
    %v1316 = vpack.c.b16 %v1060, %v1044
    %v1317 = vpack.c.b16 %v1061, %v1045
    %v1318 = vpack.c.b16 %v1062, %v1046
    %v1319 = vpack.c.b16 %v1063, %v1047
    %v1320 = vpack.c.b16 %v1064, %v1048
    %v1321 = vpack.c.b16 %v1065, %v1049
    %v1322 = vpack.c.b16 %v1066, %v1050
    %v1323 = vpack.c.b16 %v1067, %v1051
    %v1324 = vpack.c.b16 %v1068, %v1052
    %v1325 = vpack.c.b16 %v1069, %v1053
    %v1326 = vpack.c.b16 %v1070, %v1054
    %v1327 = vpack.c.b16 %v1071, %v1055
    %v1328 = vpack.c.b16 %v1072, %v1056
    %v1329 = vpack.c.b16 %v1073, %v1057
    %v1330 = vpack.c.b16 %v1074, %v1058
    %v1331 = vpack.c.b16 %v1075, %v1059
    %1588 = vmatprep.subr.bf16.mxu0 %v1077
    %1589 = vmatpush1.bf16.msra.mxu0 %v1076
    %1590 = vmatprep.subr.bf16.mxu0 %v1093
    %1591 = vmatpush1.bf16.msra.mxu0 %v1092
    %1592 = vmatprep.subr.bf16.mxu0 %v1109
    %1593 = vmatpush1.bf16.msra.mxu0 %v1108
    %1594 = vmatprep.subr.bf16.mxu0 %v1125
    %1595 = vmatpush1.bf16.msra.mxu0 %v1124
    %1596 = vmatprep.subr.bf16.mxu0 %v1141
    %1597 = vmatpush1.bf16.msra.mxu0 %v1140
    %1598 = vmatprep.subr.bf16.mxu0 %v1157
    %1599 = vmatpush1.bf16.msra.mxu0 %v1156
    %1600 = vmatprep.subr.bf16.mxu0 %v1173
    %1601 = vmatpush1.bf16.msra.mxu0 %v1172
    %1602 = vmatprep.subr.bf16.mxu0 %v1189
    %1603 = vmatpush1.bf16.msra.mxu0 %v1188
    %1604 = vmatprep.subr.bf16.mxu0 %v1205
    %1605 = vmatpush1.bf16.msra.mxu0 %v1204
    %1606 = vmatprep.subr.bf16.mxu0 %v1221
    %1607 = vmatpush1.bf16.msra.mxu0 %v1220
    %1608 = vmatprep.subr.bf16.mxu0 %v1237
    %1609 = vmatpush1.bf16.msra.mxu0 %v1236
    %1610 = vmatprep.subr.bf16.mxu0 %v1253
    %1611 = vmatpush1.bf16.msra.mxu0 %v1252
    %1612 = vmatprep.subr.bf16.mxu0 %v1269
    %1613 = vmatpush1.bf16.msra.mxu0 %v1268
    %1614 = vmatprep.subr.bf16.mxu0 %v1285
    %1615 = vmatpush1.bf16.msra.mxu0 %v1284
    %1616 = vmatprep.subr.bf16.mxu0 %v1301
    %1617 = vmatpush1.bf16.msra.mxu0 %v1300
    %1618 = vmatprep.subr.bf16.mxu0 %v1317
    %1619 = vmatpush1.bf16.msra.mxu0 %v1316
    %1620 = vmatprep.mubr.bf16.mxu0 %v305
    %1621 = vmatmul.mubr.bf16.gmra.mrb[0].mxu0 %v304
    %v1622 = vpop.f32.mrb[0].mxu0
    %v1623 = vadd.f32 0.0, %v1622
    %v1624 = vpop.f32.mrb[0].mxu0
    %v1625 = vadd.f32 0.0, %v1624
    %v1626 = vpop.f32.mrb[0].mxu0
    %v1627 = vadd.f32 0.0, %v1626
    %v1628 = vpop.f32.mrb[0].mxu0
    %v1629 = vadd.f32 0.0, %v1628
    %1630 = vdwg.mxu0
    %1631 = vmatprep.subr.bf16.mxu0 %v1079
    %1632 = vmatpush1.bf16.msra.mxu0 %v1078
    %1633 = vmatprep.subr.bf16.mxu0 %v1095
    %1634 = vmatpush1.bf16.msra.mxu0 %v1094
    %1635 = vmatprep.subr.bf16.mxu0 %v1111
    %1636 = vmatpush1.bf16.msra.mxu0 %v1110
    %1637 = vmatprep.subr.bf16.mxu0 %v1127
    %1638 = vmatpush1.bf16.msra.mxu0 %v1126
    %1639 = vmatprep.subr.bf16.mxu0 %v1143
    %1640 = vmatpush1.bf16.msra.mxu0 %v1142
    %1641 = vmatprep.subr.bf16.mxu0 %v1159
    %1642 = vmatpush1.bf16.msra.mxu0 %v1158
    %1643 = vmatprep.subr.bf16.mxu0 %v1175
    %1644 = vmatpush1.bf16.msra.mxu0 %v1174
    %1645 = vmatprep.subr.bf16.mxu0 %v1191
    %1646 = vmatpush1.bf16.msra.mxu0 %v1190
    %1647 = vmatprep.subr.bf16.mxu0 %v1207
    %1648 = vmatpush1.bf16.msra.mxu0 %v1206
    %1649 = vmatprep.subr.bf16.mxu0 %v1223
    %1650 = vmatpush1.bf16.msra.mxu0 %v1222
    %1651 = vmatprep.subr.bf16.mxu0 %v1239
    %1652 = vmatpush1.bf16.msra.mxu0 %v1238
    %1653 = vmatprep.subr.bf16.mxu0 %v1255
    %1654 = vmatpush1.bf16.msra.mxu0 %v1254
    %1655 = vmatprep.subr.bf16.mxu0 %v1271
    %1656 = vmatpush1.bf16.msra.mxu0 %v1270
    %1657 = vmatprep.subr.bf16.mxu0 %v1287
    %1658 = vmatpush1.bf16.msra.mxu0 %v1286
    %1659 = vmatprep.subr.bf16.mxu0 %v1303
    %1660 = vmatpush1.bf16.msra.mxu0 %v1302
    %1661 = vmatprep.subr.bf16.mxu0 %v1319
    %1662 = vmatpush1.bf16.msra.mxu0 %v1318
    %1663 = vmatprep.mubr.bf16.mxu0 %v305
    %1664 = vmatmul.mubr.bf16.gmra.mrb[0].mxu0 %v304
    %v1665 = vpop.f32.mrb[0].mxu0
    %v1666 = vadd.f32 0.0, %v1665
    %v1667 = vpop.f32.mrb[0].mxu0
    %v1668 = vadd.f32 0.0, %v1667
    %v1669 = vpop.f32.mrb[0].mxu0
    %v1670 = vadd.f32 0.0, %v1669
    %v1671 = vpop.f32.mrb[0].mxu0
    %v1672 = vadd.f32 0.0, %v1671
    %1673 = vdwg.mxu0
    %1674 = vmatprep.subr.bf16.mxu0 %v1081
    %1675 = vmatpush1.bf16.msra.mxu0 %v1080
    %1676 = vmatprep.subr.bf16.mxu0 %v1097
    %1677 = vmatpush1.bf16.msra.mxu0 %v1096
    %1678 = vmatprep.subr.bf16.mxu0 %v1113
    %1679 = vmatpush1.bf16.msra.mxu0 %v1112
    %1680 = vmatprep.subr.bf16.mxu0 %v1129
    %1681 = vmatpush1.bf16.msra.mxu0 %v1128
    %1682 = vmatprep.subr.bf16.mxu0 %v1145
    %1683 = vmatpush1.bf16.msra.mxu0 %v1144
    %1684 = vmatprep.subr.bf16.mxu0 %v1161
    %1685 = vmatpush1.bf16.msra.mxu0 %v1160
    %1686 = vmatprep.subr.bf16.mxu0 %v1177
    %1687 = vmatpush1.bf16.msra.mxu0 %v1176
    %1688 = vmatprep.subr.bf16.mxu0 %v1193
    %1689 = vmatpush1.bf16.msra.mxu0 %v1192
    %1690 = vmatprep.subr.bf16.mxu0 %v1209
    %1691 = vmatpush1.bf16.msra.mxu0 %v1208
    %1692 = vmatprep.subr.bf16.mxu0 %v1225
    %1693 = vmatpush1.bf16.msra.mxu0 %v1224
    %1694 = vmatprep.subr.bf16.mxu0 %v1241
    %1695 = vmatpush1.bf16.msra.mxu0 %v1240
    %1696 = vmatprep.subr.bf16.mxu0 %v1257
    %1697 = vmatpush1.bf16.msra.mxu0 %v1256
    %1698 = vmatprep.subr.bf16.mxu0 %v1273
    %1699 = vmatpush1.bf16.msra.mxu0 %v1272
    %1700 = vmatprep.subr.bf16.mxu0 %v1289
    %1701 = vmatpush1.bf16.msra.mxu0 %v1288
    %1702 = vmatprep.subr.bf16.mxu0 %v1305
    %1703 = vmatpush1.bf16.msra.mxu0 %v1304
    %1704 = vmatprep.subr.bf16.mxu0 %v1321
    %1705 = vmatpush1.bf16.msra.mxu0 %v1320
    %1706 = vmatprep.mubr.bf16.mxu0 %v305
    %1707 = vmatmul.mubr.bf16.gmra.mrb[0].mxu0 %v304
    %v1708 = vpop.f32.mrb[0].mxu0
    %v1709 = vadd.f32 0.0, %v1708
    %v1710 = vpop.f32.mrb[0].mxu0
    %v1711 = vadd.f32 0.0, %v1710
    %v1712 = vpop.f32.mrb[0].mxu0
    %v1713 = vadd.f32 0.0, %v1712
    %v1714 = vpop.f32.mrb[0].mxu0
    %v1715 = vadd.f32 0.0, %v1714
    %1716 = vdwg.mxu0
    %1717 = vmatprep.subr.bf16.mxu0 %v1083
    %1718 = vmatpush1.bf16.msra.mxu0 %v1082
    %1719 = vmatprep.subr.bf16.mxu0 %v1099
    %1720 = vmatpush1.bf16.msra.mxu0 %v1098
    %1721 = vmatprep.subr.bf16.mxu0 %v1115
    %1722 = vmatpush1.bf16.msra.mxu0 %v1114
    %1723 = vmatprep.subr.bf16.mxu0 %v1131
    %1724 = vmatpush1.bf16.msra.mxu0 %v1130
    %1725 = vmatprep.subr.bf16.mxu0 %v1147
    %1726 = vmatpush1.bf16.msra.mxu0 %v1146
    %1727 = vmatprep.subr.bf16.mxu0 %v1163
    %1728 = vmatpush1.bf16.msra.mxu0 %v1162
    %1729 = vmatprep.subr.bf16.mxu0 %v1179
    %1730 = vmatpush1.bf16.msra.mxu0 %v1178
    %1731 = vmatprep.subr.bf16.mxu0 %v1195
    %1732 = vmatpush1.bf16.msra.mxu0 %v1194
    %1733 = vmatprep.subr.bf16.mxu0 %v1211
    %1734 = vmatpush1.bf16.msra.mxu0 %v1210
    %1735 = vmatprep.subr.bf16.mxu0 %v1227
    %1736 = vmatpush1.bf16.msra.mxu0 %v1226
    %1737 = vmatprep.subr.bf16.mxu0 %v1243
    %1738 = vmatpush1.bf16.msra.mxu0 %v1242
    %1739 = vmatprep.subr.bf16.mxu0 %v1259
    %1740 = vmatpush1.bf16.msra.mxu0 %v1258
    %1741 = vmatprep.subr.bf16.mxu0 %v1275
    %1742 = vmatpush1.bf16.msra.mxu0 %v1274
    %1743 = vmatprep.subr.bf16.mxu0 %v1291
    %1744 = vmatpush1.bf16.msra.mxu0 %v1290
    %1745 = vmatprep.subr.bf16.mxu0 %v1307
    %1746 = vmatpush1.bf16.msra.mxu0 %v1306
    %1747 = vmatprep.subr.bf16.mxu0 %v1323
    %1748 = vmatpush1.bf16.msra.mxu0 %v1322
    %1749 = vmatprep.mubr.bf16.mxu0 %v305
    %1750 = vmatmul.mubr.bf16.gmra.mrb[0].mxu0 %v304
    %v1751 = vpop.f32.mrb[0].mxu0
    %v1752 = vadd.f32 0.0, %v1751
    %v1753 = vpop.f32.mrb[0].mxu0
    %v1754 = vadd.f32 0.0, %v1753
    %v1755 = vpop.f32.mrb[0].mxu0
    %v1756 = vadd.f32 0.0, %v1755
    %v1757 = vpop.f32.mrb[0].mxu0
    %v1758 = vadd.f32 0.0, %v1757
    %1759 = vdwg.mxu0
    %1760 = vmatprep.subr.bf16.mxu0 %v1085
    %1761 = vmatpush1.bf16.msra.mxu0 %v1084
    %1762 = vmatprep.subr.bf16.mxu0 %v1101
    %1763 = vmatpush1.bf16.msra.mxu0 %v1100
    %1764 = vmatprep.subr.bf16.mxu0 %v1117
    %1765 = vmatpush1.bf16.msra.mxu0 %v1116
    %1766 = vmatprep.subr.bf16.mxu0 %v1133
    %1767 = vmatpush1.bf16.msra.mxu0 %v1132
    %1768 = vmatprep.subr.bf16.mxu0 %v1149
    %1769 = vmatpush1.bf16.msra.mxu0 %v1148
    %1770 = vmatprep.subr.bf16.mxu0 %v1165
    %1771 = vmatpush1.bf16.msra.mxu0 %v1164
    %1772 = vmatprep.subr.bf16.mxu0 %v1181
    %1773 = vmatpush1.bf16.msra.mxu0 %v1180
    %1774 = vmatprep.subr.bf16.mxu0 %v1197
    %1775 = vmatpush1.bf16.msra.mxu0 %v1196
    %1776 = vmatprep.subr.bf16.mxu0 %v1213
    %1777 = vmatpush1.bf16.msra.mxu0 %v1212
    %1778 = vmatprep.subr.bf16.mxu0 %v1229
    %1779 = vmatpush1.bf16.msra.mxu0 %v1228
    %1780 = vmatprep.subr.bf16.mxu0 %v1245
    %1781 = vmatpush1.bf16.msra.mxu0 %v1244
    %1782 = vmatprep.subr.bf16.mxu0 %v1261
    %1783 = vmatpush1.bf16.msra.mxu0 %v1260
    %1784 = vmatprep.subr.bf16.mxu0 %v1277
    %1785 = vmatpush1.bf16.msra.mxu0 %v1276
    %1786 = vmatprep.subr.bf16.mxu0 %v1293
    %1787 = vmatpush1.bf16.msra.mxu0 %v1292
    %1788 = vmatprep.subr.bf16.mxu0 %v1309
    %1789 = vmatpush1.bf16.msra.mxu0 %v1308
    %1790 = vmatprep.subr.bf16.mxu0 %v1325
    %1791 = vmatpush1.bf16.msra.mxu0 %v1324
    %1792 = vmatprep.mubr.bf16.mxu0 %v305
    %1793 = vmatmul.mubr.bf16.gmra.mrb[0].mxu0 %v304
    %v1794 = vpop.f32.mrb[0].mxu0
    %v1795 = vadd.f32 0.0, %v1794
    %v1796 = vpop.f32.mrb[0].mxu0
    %v1797 = vadd.f32 0.0, %v1796
    %v1798 = vpop.f32.mrb[0].mxu0
    %v1799 = vadd.f32 0.0, %v1798
    %v1800 = vpop.f32.mrb[0].mxu0
    %v1801 = vadd.f32 0.0, %v1800
    %1802 = vdwg.mxu0
    %1803 = vmatprep.subr.bf16.mxu0 %v1087
    %1804 = vmatpush1.bf16.msra.mxu0 %v1086
    %1805 = vmatprep.subr.bf16.mxu0 %v1103
    %1806 = vmatpush1.bf16.msra.mxu0 %v1102
    %1807 = vmatprep.subr.bf16.mxu0 %v1119
    %1808 = vmatpush1.bf16.msra.mxu0 %v1118
    %1809 = vmatprep.subr.bf16.mxu0 %v1135
    %1810 = vmatpush1.bf16.msra.mxu0 %v1134
    %1811 = vmatprep.subr.bf16.mxu0 %v1151
    %1812 = vmatpush1.bf16.msra.mxu0 %v1150
    %1813 = vmatprep.subr.bf16.mxu0 %v1167
    %1814 = vmatpush1.bf16.msra.mxu0 %v1166
    %1815 = vmatprep.subr.bf16.mxu0 %v1183
    %1816 = vmatpush1.bf16.msra.mxu0 %v1182
    %1817 = vmatprep.subr.bf16.mxu0 %v1199
    %1818 = vmatpush1.bf16.msra.mxu0 %v1198
    %1819 = vmatprep.subr.bf16.mxu0 %v1215
    %1820 = vmatpush1.bf16.msra.mxu0 %v1214
    %1821 = vmatprep.subr.bf16.mxu0 %v1231
    %1822 = vmatpush1.bf16.msra.mxu0 %v1230
    %1823 = vmatprep.subr.bf16.mxu0 %v1247
    %1824 = vmatpush1.bf16.msra.mxu0 %v1246
    %1825 = vmatprep.subr.bf16.mxu0 %v1263
    %1826 = vmatpush1.bf16.msra.mxu0 %v1262
    %1827 = vmatprep.subr.bf16.mxu0 %v1279
    %1828 = vmatpush1.bf16.msra.mxu0 %v1278
    %1829 = vmatprep.subr.bf16.mxu0 %v1295
    %1830 = vmatpush1.bf16.msra.mxu0 %v1294
    %1831 = vmatprep.subr.bf16.mxu0 %v1311
    %1832 = vmatpush1.bf16.msra.mxu0 %v1310
    %1833 = vmatprep.subr.bf16.mxu0 %v1327
    %1834 = vmatpush1.bf16.msra.mxu0 %v1326
    %1835 = vmatprep.mubr.bf16.mxu0 %v305
    %1836 = vmatmul.mubr.bf16.gmra.mrb[0].mxu0 %v304
    %v1837 = vpop.f32.mrb[0].mxu0
    %v1838 = vadd.f32 0.0, %v1837
    %v1839 = vpop.f32.mrb[0].mxu0
    %v1840 = vadd.f32 0.0, %v1839
    %v1841 = vpop.f32.mrb[0].mxu0
    %v1842 = vadd.f32 0.0, %v1841
    %v1843 = vpop.f32.mrb[0].mxu0
    %v1844 = vadd.f32 0.0, %v1843
    %1845 = vdwg.mxu0
    %1846 = vmatprep.subr.bf16.mxu0 %v1089
    %1847 = vmatpush1.bf16.msra.mxu0 %v1088
    %1848 = vmatprep.subr.bf16.mxu0 %v1105
    %1849 = vmatpush1.bf16.msra.mxu0 %v1104
    %1850 = vmatprep.subr.bf16.mxu0 %v1121
    %1851 = vmatpush1.bf16.msra.mxu0 %v1120
    %1852 = vmatprep.subr.bf16.mxu0 %v1137
    %1853 = vmatpush1.bf16.msra.mxu0 %v1136
    %1854 = vmatprep.subr.bf16.mxu0 %v1153
    %1855 = vmatpush1.bf16.msra.mxu0 %v1152
    %1856 = vmatprep.subr.bf16.mxu0 %v1169
    %1857 = vmatpush1.bf16.msra.mxu0 %v1168
    %1858 = vmatprep.subr.bf16.mxu0 %v1185
    %1859 = vmatpush1.bf16.msra.mxu0 %v1184
    %1860 = vmatprep.subr.bf16.mxu0 %v1201
    %1861 = vmatpush1.bf16.msra.mxu0 %v1200
    %1862 = vmatprep.subr.bf16.mxu0 %v1217
    %1863 = vmatpush1.bf16.msra.mxu0 %v1216
    %1864 = vmatprep.subr.bf16.mxu0 %v1233
    %1865 = vmatpush1.bf16.msra.mxu0 %v1232
    %1866 = vmatprep.subr.bf16.mxu0 %v1249
    %1867 = vmatpush1.bf16.msra.mxu0 %v1248
    %1868 = vmatprep.subr.bf16.mxu0 %v1265
    %1869 = vmatpush1.bf16.msra.mxu0 %v1264
    %1870 = vmatprep.subr.bf16.mxu0 %v1281
    %1871 = vmatpush1.bf16.msra.mxu0 %v1280
    %1872 = vmatprep.subr.bf16.mxu0 %v1297
    %1873 = vmatpush1.bf16.msra.mxu0 %v1296
    %1874 = vmatprep.subr.bf16.mxu0 %v1313
    %1875 = vmatpush1.bf16.msra.mxu0 %v1312
    %1876 = vmatprep.subr.bf16.mxu0 %v1329
    %1877 = vmatpush1.bf16.msra.mxu0 %v1328
    %1878 = vmatprep.mubr.bf16.mxu0 %v305
    %1879 = vmatmul.mubr.bf16.gmra.mrb[0].mxu0 %v304
    %v1880 = vpop.f32.mrb[0].mxu0
    %v1881 = vadd.f32 0.0, %v1880
    %v1882 = vpop.f32.mrb[0].mxu0
    %v1883 = vadd.f32 0.0, %v1882
    %v1884 = vpop.f32.mrb[0].mxu0
    %v1885 = vadd.f32 0.0, %v1884
    %v1886 = vpop.f32.mrb[0].mxu0
    %v1887 = vadd.f32 0.0, %v1886
    %1888 = vdwg.mxu0
    %1889 = vmatprep.subr.bf16.mxu0 %v1091
    %1890 = vmatpush1.bf16.msra.mxu0 %v1090
    %1891 = vmatprep.subr.bf16.mxu0 %v1107
    %1892 = vmatpush1.bf16.msra.mxu0 %v1106
    %1893 = vmatprep.subr.bf16.mxu0 %v1123
    %1894 = vmatpush1.bf16.msra.mxu0 %v1122
    %1895 = vmatprep.subr.bf16.mxu0 %v1139
    %1896 = vmatpush1.bf16.msra.mxu0 %v1138
    %1897 = vmatprep.subr.bf16.mxu0 %v1155
    %1898 = vmatpush1.bf16.msra.mxu0 %v1154
    %1899 = vmatprep.subr.bf16.mxu0 %v1171
    %1900 = vmatpush1.bf16.msra.mxu0 %v1170
    %1901 = vmatprep.subr.bf16.mxu0 %v1187
    %1902 = vmatpush1.bf16.msra.mxu0 %v1186
    %1903 = vmatprep.subr.bf16.mxu0 %v1203
    %1904 = vmatpush1.bf16.msra.mxu0 %v1202
    %1905 = vmatprep.subr.bf16.mxu0 %v1219
    %1906 = vmatpush1.bf16.msra.mxu0 %v1218
    %1907 = vmatprep.subr.bf16.mxu0 %v1235
    %1908 = vmatpush1.bf16.msra.mxu0 %v1234
    %1909 = vmatprep.subr.bf16.mxu0 %v1251
    %1910 = vmatpush1.bf16.msra.mxu0 %v1250
    %1911 = vmatprep.subr.bf16.mxu0 %v1267
    %1912 = vmatpush1.bf16.msra.mxu0 %v1266
    %1913 = vmatprep.subr.bf16.mxu0 %v1283
    %1914 = vmatpush1.bf16.msra.mxu0 %v1282
    %1915 = vmatprep.subr.bf16.mxu0 %v1299
    %1916 = vmatpush1.bf16.msra.mxu0 %v1298
    %1917 = vmatprep.subr.bf16.mxu0 %v1315
    %1918 = vmatpush1.bf16.msra.mxu0 %v1314
    %1919 = vmatprep.subr.bf16.mxu0 %v1331
    %1920 = vmatpush1.bf16.msra.mxu0 %v1330
    %1921 = vmatprep.mubr.bf16.mxu0 %v305
    %1922 = vmatmul.mubr.bf16.gmra.mrb[0].mxu0 %v304
    %v1923 = vpop.f32.mrb[0].mxu0
    %v1924 = vadd.f32 0.0, %v1923
    %v1925 = vpop.f32.mrb[0].mxu0
    %v1926 = vadd.f32 0.0, %v1925
    %v1927 = vpop.f32.mrb[0].mxu0
    %v1928 = vadd.f32 0.0, %v1927
    %v1929 = vpop.f32.mrb[0].mxu0
    %v1930 = vadd.f32 0.0, %v1929
    %1931 = vdwg.mxu0
    %v1932 = vmax.f32 %v1623, -1.0
    %v1933 = vmax.f32 %v1625, -1.0
    %v1934 = vmax.f32 %v1666, -1.0
    %v1935 = vmax.f32 %v1668, -1.0
    %v1936 = vmax.f32 %v1709, -1.0
    %v1937 = vmax.f32 %v1711, -1.0
    %v1938 = vmax.f32 %v1752, -1.0
    %v1939 = vmax.f32 %v1754, -1.0
    %v1940 = vmax.f32 %v1795, -1.0
    %v1941 = vmax.f32 %v1797, -1.0
    %v1942 = vmax.f32 %v1838, -1.0
    %v1943 = vmax.f32 %v1840, -1.0
    %v1944 = vmax.f32 %v1881, -1.0
    %v1945 = vmax.f32 %v1883, -1.0
    %v1946 = vmax.f32 %v1924, -1.0
    %v1947 = vmax.f32 %v1926, -1.0
    %v1948 = vmax.f32 %v1627, -1.0
    %v1949 = vmax.f32 %v1629, -1.0
    %v1950 = vmax.f32 %v1670, -1.0
    %v1951 = vmax.f32 %v1672, -1.0
    %v1952 = vmax.f32 %v1713, -1.0
    %v1953 = vmax.f32 %v1715, -1.0
    %v1954 = vmax.f32 %v1756, -1.0
    %v1955 = vmax.f32 %v1758, -1.0
    %v1956 = vmax.f32 %v1799, -1.0
    %v1957 = vmax.f32 %v1801, -1.0
    %v1958 = vmax.f32 %v1842, -1.0
    %v1959 = vmax.f32 %v1844, -1.0
    %v1960 = vmax.f32 %v1885, -1.0
    %v1961 = vmax.f32 %v1887, -1.0
    %v1962 = vmax.f32 %v1928, -1.0
    %v1963 = vmax.f32 %v1930, -1.0
    %v1964 = vmin.f32 %v1932, 1.0
    %v1965 = vmin.f32 %v1933, 1.0
    %v1966 = vmin.f32 %v1934, 1.0
    %v1967 = vmin.f32 %v1935, 1.0
    %v1968 = vmin.f32 %v1936, 1.0
    %v1969 = vmin.f32 %v1937, 1.0
    %v1970 = vmin.f32 %v1938, 1.0
    %v1971 = vmin.f32 %v1939, 1.0
    %v1972 = vmin.f32 %v1940, 1.0
    %v1973 = vmin.f32 %v1941, 1.0
    %v1974 = vmin.f32 %v1942, 1.0
    %v1975 = vmin.f32 %v1943, 1.0
    %v1976 = vmin.f32 %v1944, 1.0
    %v1977 = vmin.f32 %v1945, 1.0
    %v1978 = vmin.f32 %v1946, 1.0
    %v1979 = vmin.f32 %v1947, 1.0
    %v1980 = vmin.f32 %v1948, 1.0
    %v1981 = vmin.f32 %v1949, 1.0
    %v1982 = vmin.f32 %v1950, 1.0
    %v1983 = vmin.f32 %v1951, 1.0
    %v1984 = vmin.f32 %v1952, 1.0
    %v1985 = vmin.f32 %v1953, 1.0
    %v1986 = vmin.f32 %v1954, 1.0
    %v1987 = vmin.f32 %v1955, 1.0
    %v1988 = vmin.f32 %v1956, 1.0
    %v1989 = vmin.f32 %v1957, 1.0
    %v1990 = vmin.f32 %v1958, 1.0
    %v1991 = vmin.f32 %v1959, 1.0
    %v1992 = vmin.f32 %v1960, 1.0
    %v1993 = vmin.f32 %v1961, 1.0
    %v1994 = vmin.f32 %v1962, 1.0
    %v1995 = vmin.f32 %v1963, 1.0
    %v1996 = vmul.f32 %v1964, 30.0
    %v1997 = vmul.f32 %v1965, 30.0
    %v1998 = vmul.f32 %v1966, 30.0
    %v1999 = vmul.f32 %v1967, 30.0
    %v2000 = vmul.f32 %v1968, 30.0
    %v2001 = vmul.f32 %v1969, 30.0
    %v2002 = vmul.f32 %v1970, 30.0
    %v2003 = vmul.f32 %v1971, 30.0
    %v2004 = vmul.f32 %v1972, 30.0
    %v2005 = vmul.f32 %v1973, 30.0
    %v2006 = vmul.f32 %v1974, 30.0
    %v2007 = vmul.f32 %v1975, 30.0
    %v2008 = vmul.f32 %v1976, 30.0
    %v2009 = vmul.f32 %v1977, 30.0
    %v2010 = vmul.f32 %v1978, 30.0
    %v2011 = vmul.f32 %v1979, 30.0
    %v2012 = vmul.f32 %v1980, 30.0
    %v2013 = vmul.f32 %v1981, 30.0
    %v2014 = vmul.f32 %v1982, 30.0
    %v2015 = vmul.f32 %v1983, 30.0
    %v2016 = vmul.f32 %v1984, 30.0
    %v2017 = vmul.f32 %v1985, 30.0
    %v2018 = vmul.f32 %v1986, 30.0
    %v2019 = vmul.f32 %v1987, 30.0
    %v2020 = vmul.f32 %v1988, 30.0
    %v2021 = vmul.f32 %v1989, 30.0
    %v2022 = vmul.f32 %v1990, 30.0
    %v2023 = vmul.f32 %v1991, 30.0
    %v2024 = vmul.f32 %v1992, 30.0
    %v2025 = vmul.f32 %v1993, 30.0
    %v2026 = vmul.f32 %v1994, 30.0
    %v2027 = vmul.f32 %v1995, 30.0
    %2028 = vst [vmem:[#allocation7] sm:$0xff] %v1996
    %2029 = vst [vmem:[#allocation7 + $0x8] sm:$0xff] %v1997
    %2030 = vst [vmem:[#allocation7 + $0x10] sm:$0xff] %v1998
    %2031 = vst [vmem:[#allocation7 + $0x18] sm:$0xff] %v1999
    %2032 = vst [vmem:[#allocation7 + $0x20] sm:$0xff] %v2000
    %2033 = vst [vmem:[#allocation7 + $0x28] sm:$0xff] %v2001
    %2034 = vst [vmem:[#allocation7 + $0x30] sm:$0xff] %v2002
    %2035 = vst [vmem:[#allocation7 + $0x38] sm:$0xff] %v2003
    %2036 = vst [vmem:[#allocation7 + $0x40] sm:$0xff] %v2004
    %2037 = vst [vmem:[#allocation7 + $0x48] sm:$0xff] %v2005
    %2038 = vst [vmem:[#allocation7 + $0x50] sm:$0xff] %v2006
    %2039 = vst [vmem:[#allocation7 + $0x58] sm:$0xff] %v2007
    %2040 = vst [vmem:[#allocation7 + $0x60] sm:$0xff] %v2008
    %2041 = vst [vmem:[#allocation7 + $0x68] sm:$0xff] %v2009
    %2042 = vst [vmem:[#allocation7 + $0x70] sm:$0xff] %v2010
    %2043 = vst [vmem:[#allocation7 + $0x78] sm:$0xff] %v2011
    %2044 = vst [vmem:[#allocation7 + $0x80] sm:$0xff] %v2012
    %2045 = vst [vmem:[#allocation7 + $0x88] sm:$0xff] %v2013
    %2046 = vst [vmem:[#allocation7 + $0x90] sm:$0xff] %v2014
    %2047 = vst [vmem:[#allocation7 + $0x98] sm:$0xff] %v2015
    %2048 = vst [vmem:[#allocation7 + $0xa0] sm:$0xff] %v2016
    %2049 = vst [vmem:[#allocation7 + $0xa8] sm:$0xff] %v2017
    %2050 = vst [vmem:[#allocation7 + $0xb0] sm:$0xff] %v2018
    %2051 = vst [vmem:[#allocation7 + $0xb8] sm:$0xff] %v2019
    %2052 = vst [vmem:[#allocation7 + $0xc0] sm:$0xff] %v2020
    %2053 = vst [vmem:[#allocation7 + $0xc8] sm:$0xff] %v2021
    %2054 = vst [vmem:[#allocation7 + $0xd0] sm:$0xff] %v2022
    %2055 = vst [vmem:[#allocation7 + $0xd8] sm:$0xff] %v2023
    %2056 = vst [vmem:[#allocation7 + $0xe0] sm:$0xff] %v2024
    %2057 = vst [vmem:[#allocation7 + $0xe8] sm:$0xff] %v2025
    %2058 = vst [vmem:[#allocation7 + $0xf0] sm:$0xff] %v2026
    %2059 = vst [vmem:[#allocation7 + $0xf8] sm:$0xff] %v2027
    // Predicated region
    $region18: #{tpu_custom_call.1} parent=1 // pred_check
      _
    $region19: #{tpu_custom_call.1} parent=1 // pred_check_branch
      %2061 = sbr.rel (0) target = $region21
    $region20: #{tpu_custom_call.1} parent=1 // pred_region
      %s2063 = ssub.s32 4096, 4096
      %2064 = vsyncadd [#allocation4], %s2063
      %s2065 = sshll.u32 [#allocation7], 4
      %s2066 = int_to_ptr.vmem [resolvable:$true] %s2065
      %2071 = dma.vmem_to_hbm [thread:$0]  %s2066, 4096, %s2, [#allocation4], 2048, 2048, 128
    $region21: #{tpu_custom_call.1} parent=1 // pred_fallthru
      _
    // Predicated region
    $region22: #{tpu_custom_call.1} parent=1 // pred_check
      _
    $region23: #{tpu_custom_call.1} parent=1 // pred_check_branch
      %2073 = sbr.rel (0) target = $region25
    $region24: #{tpu_custom_call.1} parent=1 // pred_region
      %2074 = dma.done [#allocation4], 4096
    $region25: #{tpu_custom_call.1} parent=1 // pred_fallthru
      _
    %2075 = vsyncpa [#allocation3], 1
    %2076 = vsyncpa [#allocation6], 1
    %2077 = vsyncpa [#allocation4], 1

</llo_original>
